<compile_context>
chip_gen: v5e
topology: v5e:2x2
jax: 0.10.0
libtpu: 0.0.40
codegen_flags: <defaults>
</compile_context>

<pallas_src>
import functools

import jax
import jax.numpy as jnp
from jax.experimental import pallas as pl
from jax.experimental.pallas import tpu as pltpu


def _round_up(x, m):
    return (x + m - 1) // m * m


# ----------------------------------------------------------------------------
# Single fused kernel: L-layer LSTM over the full sequence + last-step FC.
# ----------------------------------------------------------------------------
def _fused_rnn_kernel(x_ref,        # (T*Bp, E)  bf16  time-major embedded tokens (flattened)
                      wx0_ref,      # (E, 4H)    bf16  layer 0 input weights (i,f,o,g cols)
                      wh0_ref,      # (H, 4H)    bf16  layer 0 recurrent weights
                      b0_ref,       # (1, 4H)    f32
                      wxr_ref,      # (max(L-1,1), H, 4H) bf16  layers 1..L-1 input weights
                      whr_ref,      # (max(L-1,1), H, 4H) bf16  layers 1..L-1 recurrent weights
                      br_ref,       # (max(L-1,1), 1, 4H) f32
                      h0_ref,       # (L, Bp, H) f32
                      c0_ref,       # (L, Bp, H) f32
                      fcw_ref,      # (H, Vpad)  bf16  fc weight, pre-transposed + padded
                      fcb_ref,      # (1, Vpad)  f32
                      logits_ref,   # (Bp, Vpad) f32   out
                      hn_ref,       # (L, Bp, H) f32   out
                      cn_ref,       # (L, Bp, H) f32   out
                      act_ref,      # (T*Bp, H)  f32   scratch: inter-layer activations
                      *, seq_len, batch_pad, hidden_dim, n_layers):
    T, Bp, H, L = seq_len, batch_pad, hidden_dim, n_layers

    def run_layer(gx, wh_bf16, h, c, store_act):
        """gx: (T*Bp, 4H) f32, precomputed input projection + bias.
        Only the recurrent h @ W_hh remains on the serial per-step chain."""
        for t in range(T):                              # small static T -> unrolled
            gates = gx[t * Bp:(t + 1) * Bp] + jnp.dot(
                h.astype(jnp.bfloat16), wh_bf16,
                preferred_element_type=jnp.float32)
            sig = jax.nn.sigmoid(gates[:, :3 * H])      # i | f | o  (one contiguous slab)
            g = jnp.tanh(gates[:, 3 * H:])              # g
            c = sig[:, H:2 * H] * c + sig[:, :H] * g
            h = sig[:, 2 * H:3 * H] * jnp.tanh(c)
            if store_act:                               # last layer's acts are never needed
                act_ref[pl.ds(t * Bp, Bp), :] = h
        return h, c

    # ---- layer 0: one whole-sequence input projection, then the recurrence ----
    gx = jnp.dot(x_ref[...], wx0_ref[...],
                 preferred_element_type=jnp.float32) + b0_ref[...]
    h, c = run_layer(gx, wh0_ref[...], h0_ref[0], c0_ref[0], store_act=(L > 1))
    hn_ref[0] = h                                       # written exactly once per layer
    cn_ref[0] = c

    # ---- layers 1..L-1: batched projection of act_ref, then the recurrence ----
    for l in range(1, L):
        gx = jnp.dot(act_ref[...].astype(jnp.bfloat16), wxr_ref[l - 1],
                     preferred_element_type=jnp.float32) + br_ref[l - 1]
        h, c = run_layer(gx, whr_ref[l - 1], h0_ref[l], c0_ref[l],
                         store_act=(l < L - 1))
        hn_ref[l] = h
        cn_ref[l] = c

    # ---- final FC folded into the same kernel (lane-dense padded output) ----
    logits_ref[...] = (jnp.dot(h.astype(jnp.bfloat16), fcw_ref[...],
                               preferred_element_type=jnp.float32)
                       + fcb_ref[...])


def fused_lstm_lm(x_flat, wx0, wh0, b0, wxr, whr, br, h0, c0, fcw, fcb,
                  *, seq_len, batch_pad, hidden_dim, n_layers):
    """x_flat: (T*Bp, E) bf16. Returns (logits (Bp, Vpad), h_n, c_n)."""
    T, Bp, H, L = seq_len, batch_pad, hidden_dim, n_layers
    v_pad = fcw.shape[1]
    kernel = functools.partial(_fused_rnn_kernel, seq_len=T, batch_pad=Bp,
                               hidden_dim=H, n_layers=L)

    # Explicit VMEM budget sized from the actual resident footprint (+2x headroom),
    # clamped to what is physically available on any supported generation.
    def nbytes(a):
        return int(a.size) * a.dtype.itemsize
    footprint = sum(nbytes(a) for a in
                    (x_flat, wx0, wh0, b0, wxr, whr, br, h0, c0, fcw, fcb))
    footprint += (Bp * v_pad + 2 * L * Bp * H + T * Bp * H) * 4   # outputs + scratch
    vmem_limit = int(min(max(2 * footprint, 4 * 1024 * 1024), 64 * 1024 * 1024))

    return pl.pallas_call(
        kernel,
        out_shape=(jax.ShapeDtypeStruct((Bp, v_pad), jnp.float32),
                   jax.ShapeDtypeStruct((L, Bp, H), jnp.float32),
                   jax.ShapeDtypeStruct((L, Bp, H), jnp.float32)),
        # No grid: sequence, weights and activations are VMEM-resident.
        scratch_shapes=[
            pltpu.VMEM((T * Bp, H), jnp.float32),   # inter-layer activations
        ],
        compiler_params=pltpu.CompilerParams(vmem_limit_bytes=vmem_limit),
    )(x_flat, wx0, wh0, b0, wxr, whr, br, h0, c0, fcw, fcb)


# ----------------------------------------------------------------------------
# RNN.forward equivalent (wrapper glue: embedding gather, batch pad, out slice)
# ----------------------------------------------------------------------------
def rnn_forward(kparams, tokens, hidden, *, vocab_size):
    """tokens: (B, T) int32; hidden: (h0, c0) each (n_layers, B, H)."""
    h0, c0 = hidden
    B, T = tokens.shape
    L, _, H = h0.shape
    Bp = _round_up(max(B, 8), 8)      # 8 f32 sublanes -> no 2/8-sublane tiles

    # Embedding gather directly in time-major order, batch-padded, flattened so
    # layer 0's input projection is a single (T*Bp, E) x (E, 4H) matmul.
    x = jnp.take(kparams["embedding"], tokens.T, axis=0)            # (T, B, E)
    x = jnp.pad(x, ((0, 0), (0, Bp - B), (0, 0)))                   # (T, Bp, E)
    E = x.shape[-1]
    x_flat = x.reshape(T * Bp, E).astype(jnp.bfloat16)              # bf16 MXU LHS

    h0p = jnp.pad(h0, ((0, 0), (0, Bp - B), (0, 0)))
    c0p = jnp.pad(c0, ((0, 0), (0, Bp - B), (0, 0)))

    logits_pad, h_n, c_n = fused_lstm_lm(
        x_flat, kparams["wx0"], kparams["wh0"], kparams["b0"],
        kparams["wxr"], kparams["whr"], kparams["br"],
        h0p, c0p, kparams["fcw"], kparams["fcb"],
        seq_len=T, batch_pad=Bp, hidden_dim=H, n_layers=L)
    return logits_pad[:B, :vocab_size], (h_n[:, :B], c_n[:, :B])


# ----------------------------------------------------------------------------
# Parameter init (PyTorch convention) and one-time kernel-layout conversion
# ----------------------------------------------------------------------------
def init_params(key, vocab_size, embedding_dim, hidden_dim, n_layers):
    """PyTorch-convention params: w_ih (4H,in), w_hh (4H,H), gate rows (i,f,g,o)."""
    params = {}
    k = key
    k, sub = jax.random.split(k)
    params["embedding"] = jax.random.normal(
        sub, (vocab_size, embedding_dim), jnp.float32) * 0.1

    scale = hidden_dim ** -0.5
    for layer in range(n_layers):
        in_dim = embedding_dim if layer == 0 else hidden_dim
        k, k1, k2, k3, k4 = jax.random.split(k, 5)
        params[f"w_ih_{layer}"] = jax.random.uniform(
            k1, (4 * hidden_dim, in_dim), jnp.float32, -scale, scale)
        params[f"w_hh_{layer}"] = jax.random.uniform(
            k2, (4 * hidden_dim, hidden_dim), jnp.float32, -scale, scale)
        params[f"b_ih_{layer}"] = jax.random.uniform(
            k3, (4 * hidden_dim,), jnp.float32, -scale, scale)
        params[f"b_hh_{layer}"] = jax.random.uniform(
            k4, (4 * hidden_dim,), jnp.float32, -scale, scale)

    k, k1, k2 = jax.random.split(k, 3)
    params["fc_w"] = jax.random.uniform(
        k1, (vocab_size, hidden_dim), jnp.float32, -scale, scale)
    params["fc_b"] = jax.random.uniform(
        k2, (vocab_size,), jnp.float32, -scale, scale)
    return params


def prepare_kernel_params(params, *, n_layers, hidden_dim, vocab_size):
    """One-time conversion of PyTorch-layout weights to the kernel layout:
    split W_x / W_hh, reorder gate rows from (i,f,g,o) to (i,f,o,g), transpose
    to (in,4H)/(H,4H), cast weights to bf16; transpose + zero-pad fc to 128
    lanes. Biases stay f32 (added post-matmul)."""
    H = hidden_dim
    perm = jnp.concatenate([jnp.arange(0, 2 * H),        # i, f
                            jnp.arange(3 * H, 4 * H),    # o
                            jnp.arange(2 * H, 3 * H)])   # g

    def split(layer):
        wx = params[f"w_ih_{layer}"][perm].T.astype(jnp.bfloat16)   # (in, 4H)
        wh = params[f"w_hh_{layer}"][perm].T.astype(jnp.bfloat16)   # (H, 4H)
        b = (params[f"b_ih_{layer}"]
             + params[f"b_hh_{layer}"])[perm].reshape(1, 4 * H)     # (1, 4H) f32
        return wx, wh, b

    wx0, wh0, b0 = split(0)
    if n_layers > 1:
        rest = [split(l) for l in range(1, n_layers)]
        wxr = jnp.stack([r[0] for r in rest])    # (L-1, H, 4H) bf16
        whr = jnp.stack([r[1] for r in rest])    # (L-1, H, 4H) bf16
        br = jnp.stack([r[2] for r in rest])     # (L-1, 1, 4H) f32
    else:
        wxr = jnp.zeros((1, H, 4 * H), jnp.bfloat16)   # dummy, unused when L == 1
        whr = jnp.zeros((1, H, 4 * H), jnp.bfloat16)
        br = jnp.zeros((1, 1, 4 * H), jnp.float32)

    v_pad = _round_up(vocab_size, 128)
    fcw = (jnp.zeros((H, v_pad), jnp.float32)
           .at[:, :vocab_size].set(params["fc_w"].T).astype(jnp.bfloat16))
    fcb = jnp.zeros((1, v_pad), jnp.float32).at[:, :vocab_size].set(params["fc_b"][None])

    return {"embedding": params["embedding"], "wx0": wx0, "wh0": wh0, "b0": b0,
            "wxr": wxr, "whr": whr, "br": br, "fcw": fcw, "fcb": fcb}


# ----------------------------------------------------------------------------
# Pure-JAX reference (PyTorch conventions) for a numerical smoke test
# ----------------------------------------------------------------------------
def reference_forward(params, tokens, hidden, *, n_layers, hidden_dim):
    h0, c0 = hidden
    H = hidden_dim
    hp = jax.lax.Precision.HIGHEST
    x = jnp.take(params["embedding"], tokens, axis=0)          # (B, T, E)
    hs, cs = [], []
    for l in range(n_layers):
        w_ih, w_hh = params[f"w_ih_{l}"], params[f"w_hh_{l}"]
        b = params[f"b_ih_{l}"] + params[f"b_hh_{l}"]
        h, c = h0[l], c0[l]
        ys = []
        for t in range(x.shape[1]):
            gates = (jnp.dot(x[:, t], w_ih.T, precision=hp)
                     + jnp.dot(h, w_hh.T, precision=hp) + b)
            i = jax.nn.sigmoid(gates[:, :H])
            f = jax.nn.sigmoid(gates[:, H:2 * H])
            g = jnp.tanh(gates[:, 2 * H:3 * H])
            o = jax.nn.sigmoid(gates[:, 3 * H:])
            c = f * c + i * g
            h = o * jnp.tanh(c)
            ys.append(h)
        x = jnp.stack(ys, axis=1)
        hs.append(h)
        cs.append(c)
    logits = jnp.dot(x[:, -1], params["fc_w"].T, precision=hp) + params["fc_b"]
    return logits, (jnp.stack(hs), jnp.stack(cs))


if __name__ == "__main__":
    # Small shapes consistent with the module's forward.
    VOCAB = 50          # output_size == vocab_size
    EMBED = 32
    HIDDEN = 32
    N_LAYERS = 3
    BATCH = 2
    SEQ = 8

    key = jax.random.PRNGKey(0)
    key, pkey, tkey = jax.random.split(key, 3)

    params = init_params(pkey, VOCAB, EMBED, HIDDEN, N_LAYERS)
    kparams = prepare_kernel_params(params, n_layers=N_LAYERS,
                                    hidden_dim=HIDDEN, vocab_size=VOCAB)
    tokens = jax.random.randint(tkey, (BATCH, SEQ), 0, VOCAB, dtype=jnp.int32)

    # init_hidden equivalent: zeros of shape (n_layers, batch, hidden_dim)
    h0 = jnp.zeros((N_LAYERS, BATCH, HIDDEN), jnp.float32)
    c0 = jnp.zeros((N_LAYERS, BATCH, HIDDEN), jnp.float32)

    logits, (h_n, c_n) = rnn_forward(kparams, tokens, (h0, c0), vocab_size=VOCAB)
    jax.block_until_ready((logits, h_n, c_n))

    assert logits.shape == (BATCH, VOCAB)
    assert h_n.shape == (N_LAYERS, BATCH, HIDDEN)
    assert c_n.shape == (N_LAYERS, BATCH, HIDDEN)

    # Numerical smoke test against the plain-JAX PyTorch-convention reference
    # (kernel uses bf16 MXU inputs with f32 accumulation; tolerance accounts
    # for that).
    ref_logits, (ref_h, ref_c) = reference_forward(
        params, tokens, (h0, c0), n_layers=N_LAYERS, hidden_dim=HIDDEN)
    assert float(jnp.max(jnp.abs(logits - ref_logits))) < 5e-2
    assert float(jnp.max(jnp.abs(h_n - ref_h))) < 5e-2
    assert float(jnp.max(jnp.abs(c_n - ref_c))) < 5e-2

    print("KERNEL_OK")
</pallas_src>

<mosaic_0001>
module attributes {stable_mosaic.version = 11 : i64} {
  func.func @_fused_rnn_kernel(%arg0: memref<64x32xbf16, #tpu.memory_space<vmem>>, %arg1: memref<32x128xbf16, #tpu.memory_space<vmem>>, %arg2: memref<32x128xbf16, #tpu.memory_space<vmem>>, %arg3: memref<1x128xf32, #tpu.memory_space<vmem>>, %arg4: memref<2x32x128xbf16, #tpu.memory_space<vmem>>, %arg5: memref<2x32x128xbf16, #tpu.memory_space<vmem>>, %arg6: memref<2x1x128xf32, #tpu.memory_space<vmem>>, %arg7: memref<3x8x32xf32, #tpu.memory_space<vmem>>, %arg8: memref<3x8x32xf32, #tpu.memory_space<vmem>>, %arg9: memref<32x128xbf16, #tpu.memory_space<vmem>>, %arg10: memref<1x128xf32, #tpu.memory_space<vmem>>, %arg11: memref<8x128xf32, #tpu.memory_space<vmem>>, %arg12: memref<3x8x32xf32, #tpu.memory_space<vmem>>, %arg13: memref<3x8x32xf32, #tpu.memory_space<vmem>>, %arg14: memref<64x32xf32, #tpu.memory_space<vmem>>) attributes {dimension_semantics = [], scalar_prefetch = 0 : i64, scratch_operands = 1 : i64, tpu.core_type = #tpu.core_type<tc>} {
    %c0 = arith.constant 0 : index
    %c0_0 = arith.constant 0 : index
    %0 = vector.load %arg0[%c0, %c0_0] : memref<64x32xbf16, #tpu.memory_space<vmem>>, vector<64x32xbf16>
    %c0_1 = arith.constant 0 : index
    %c0_2 = arith.constant 0 : index
    %1 = vector.load %arg1[%c0_1, %c0_2] : memref<32x128xbf16, #tpu.memory_space<vmem>>, vector<32x128xbf16>
    %cst = arith.constant dense<0.000000e+00> : vector<64x128xf32>
    %2 = tpu.matmul %0, %1, %cst {dimension_numbers = #tpu.dot_dimension_numbers<[1], [0], [0], [1], [0, 0, 1, 1], [], []>} : vector<64x32xbf16>, vector<32x128xbf16>, vector<64x128xf32> -> vector<64x128xf32>
    %c0_3 = arith.constant 0 : index
    %c0_4 = arith.constant 0 : index
    %3 = vector.load %arg3[%c0_3, %c0_4] : memref<1x128xf32, #tpu.memory_space<vmem>>, vector<1x128xf32>
    %4 = vector.broadcast %3 : vector<1x128xf32> to vector<64x128xf32>
    %5 = arith.addf %2, %4 : vector<64x128xf32>
    %c0_5 = arith.constant 0 : index
    %c0_6 = arith.constant 0 : index
    %6 = vector.load %arg2[%c0_5, %c0_6] : memref<32x128xbf16, #tpu.memory_space<vmem>>, vector<32x128xbf16>
    %c0_7 = arith.constant 0 : index
    %c0_8 = arith.constant 0 : index
    %c0_9 = arith.constant 0 : index
    %7 = vector.load %arg7[%c0_7, %c0_8, %c0_9] : memref<3x8x32xf32, #tpu.memory_space<vmem>>, vector<1x8x32xf32>
    %8 = vector.shape_cast %7 : vector<1x8x32xf32> to vector<8x32xf32>
    %c0_10 = arith.constant 0 : index
    %c0_11 = arith.constant 0 : index
    %c0_12 = arith.constant 0 : index
    %9 = vector.load %arg8[%c0_10, %c0_11, %c0_12] : memref<3x8x32xf32, #tpu.memory_space<vmem>>, vector<1x8x32xf32>
    %10 = vector.shape_cast %9 : vector<1x8x32xf32> to vector<8x32xf32>
    %11 = vector.extract_strided_slice %5 {offsets = [0, 0], sizes = [8, 128], strides = [1, 1]} : vector<64x128xf32> to vector<8x128xf32>
    %12 = arith.truncf %8 : vector<8x32xf32> to vector<8x32xbf16>
    %cst_13 = arith.constant dense<0.000000e+00> : vector<8x128xf32>
    %13 = tpu.matmul %12, %6, %cst_13 {dimension_numbers = #tpu.dot_dimension_numbers<[1], [0], [0], [1], [0, 0, 1, 1], [], []>} : vector<8x32xbf16>, vector<32x128xbf16>, vector<8x128xf32> -> vector<8x128xf32>
    %14 = arith.addf %11, %13 : vector<8x128xf32>
    %15 = vector.extract_strided_slice %14 {offsets = [0, 0], sizes = [8, 96], strides = [1, 1]} : vector<8x128xf32> to vector<8x96xf32>
    %16 = arith.negf %15 : vector<8x96xf32>
    %17 = math.exp %16 : vector<8x96xf32>
    %cst_14 = arith.constant 1.000000e+00 : f32
    %18 = vector.broadcast %cst_14 : f32 to vector<8x96xf32>
    %19 = arith.addf %18, %17 : vector<8x96xf32>
    %20 = arith.divf %18, %19 : vector<8x96xf32>
    %21 = vector.extract_strided_slice %14 {offsets = [0, 96], sizes = [8, 32], strides = [1, 1]} : vector<8x128xf32> to vector<8x32xf32>
    %22 = math.tanh %21 : vector<8x32xf32>
    %23 = vector.extract_strided_slice %20 {offsets = [0, 32], sizes = [8, 32], strides = [1, 1]} : vector<8x96xf32> to vector<8x32xf32>
    %24 = arith.mulf %23, %10 : vector<8x32xf32>
    %25 = vector.extract_strided_slice %20 {offsets = [0, 0], sizes = [8, 32], strides = [1, 1]} : vector<8x96xf32> to vector<8x32xf32>
    %26 = arith.mulf %25, %22 : vector<8x32xf32>
    %27 = arith.addf %24, %26 : vector<8x32xf32>
    %28 = vector.extract_strided_slice %20 {offsets = [0, 64], sizes = [8, 32], strides = [1, 1]} : vector<8x96xf32> to vector<8x32xf32>
    %29 = math.tanh %27 : vector<8x32xf32>
    %30 = arith.mulf %28, %29 : vector<8x32xf32>
    %c0_15 = arith.constant 0 : index
    %c0_16 = arith.constant 0 : index
    %31 = vector.load %arg14[%c0_15, %c0_16] : memref<64x32xf32, #tpu.memory_space<vmem>>, vector<8x32xf32>
    tpu.vector_store %arg14[%c0_15, %c0_16], %30 {strides = array<i32>} : memref<64x32xf32, #tpu.memory_space<vmem>>, vector<8x32xf32>,
    %32 = vector.extract_strided_slice %5 {offsets = [8, 0], sizes = [8, 128], strides = [1, 1]} : vector<64x128xf32> to vector<8x128xf32>
    %33 = arith.truncf %30 : vector<8x32xf32> to vector<8x32xbf16>
    %cst_17 = arith.constant dense<0.000000e+00> : vector<8x128xf32>
    %34 = tpu.matmul %33, %6, %cst_17 {dimension_numbers = #tpu.dot_dimension_numbers<[1], [0], [0], [1], [0, 0, 1, 1], [], []>} : vector<8x32xbf16>, vector<32x128xbf16>, vector<8x128xf32> -> vector<8x128xf32>
    %35 = arith.addf %32, %34 : vector<8x128xf32>
    %36 = vector.extract_strided_slice %35 {offsets = [0, 0], sizes = [8, 96], strides = [1, 1]} : vector<8x128xf32> to vector<8x96xf32>
    %37 = arith.negf %36 : vector<8x96xf32>
    %38 = math.exp %37 : vector<8x96xf32>
    %cst_18 = arith.constant 1.000000e+00 : f32
    %39 = vector.broadcast %cst_18 : f32 to vector<8x96xf32>
    %40 = arith.addf %39, %38 : vector<8x96xf32>
    %41 = arith.divf %39, %40 : vector<8x96xf32>
    %42 = vector.extract_strided_slice %35 {offsets = [0, 96], sizes = [8, 32], strides = [1, 1]} : vector<8x128xf32> to vector<8x32xf32>
    %43 = math.tanh %42 : vector<8x32xf32>
    %44 = vector.extract_strided_slice %41 {offsets = [0, 32], sizes = [8, 32], strides = [1, 1]} : vector<8x96xf32> to vector<8x32xf32>
    %45 = arith.mulf %44, %27 : vector<8x32xf32>
    %46 = vector.extract_strided_slice %41 {offsets = [0, 0], sizes = [8, 32], strides = [1, 1]} : vector<8x96xf32> to vector<8x32xf32>
    %47 = arith.mulf %46, %43 : vector<8x32xf32>
    %48 = arith.addf %45, %47 : vector<8x32xf32>
    %49 = vector.extract_strided_slice %41 {offsets = [0, 64], sizes = [8, 32], strides = [1, 1]} : vector<8x96xf32> to vector<8x32xf32>
    %50 = math.tanh %48 : vector<8x32xf32>
    %51 = arith.mulf %49, %50 : vector<8x32xf32>
    %c8 = arith.constant 8 : index
    %c0_19 = arith.constant 0 : index
    %52 = vector.load %arg14[%c8, %c0_19] : memref<64x32xf32, #tpu.memory_space<vmem>>, vector<8x32xf32>
    tpu.vector_store %arg14[%c8, %c0_19], %51 {strides = array<i32>} : memref<64x32xf32, #tpu.memory_space<vmem>>, vector<8x32xf32>,
    %53 = vector.extract_strided_slice %5 {offsets = [16, 0], sizes = [8, 128], strides = [1, 1]} : vector<64x128xf32> to vector<8x128xf32>
    %54 = arith.truncf %51 : vector<8x32xf32> to vector<8x32xbf16>
    %cst_20 = arith.constant dense<0.000000e+00> : vector<8x128xf32>
    %55 = tpu.matmul %54, %6, %cst_20 {dimension_numbers = #tpu.dot_dimension_numbers<[1], [0], [0], [1], [0, 0, 1, 1], [], []>} : vector<8x32xbf16>, vector<32x128xbf16>, vector<8x128xf32> -> vector<8x128xf32>
    %56 = arith.addf %53, %55 : vector<8x128xf32>
    %57 = vector.extract_strided_slice %56 {offsets = [0, 0], sizes = [8, 96], strides = [1, 1]} : vector<8x128xf32> to vector<8x96xf32>
    %58 = arith.negf %57 : vector<8x96xf32>
    %59 = math.exp %58 : vector<8x96xf32>
    %cst_21 = arith.constant 1.000000e+00 : f32
    %60 = vector.broadcast %cst_21 : f32 to vector<8x96xf32>
    %61 = arith.addf %60, %59 : vector<8x96xf32>
    %62 = arith.divf %60, %61 : vector<8x96xf32>
    %63 = vector.extract_strided_slice %56 {offsets = [0, 96], sizes = [8, 32], strides = [1, 1]} : vector<8x128xf32> to vector<8x32xf32>
    %64 = math.tanh %63 : vector<8x32xf32>
    %65 = vector.extract_strided_slice %62 {offsets = [0, 32], sizes = [8, 32], strides = [1, 1]} : vector<8x96xf32> to vector<8x32xf32>
    %66 = arith.mulf %65, %48 : vector<8x32xf32>
    %67 = vector.extract_strided_slice %62 {offsets = [0, 0], sizes = [8, 32], strides = [1, 1]} : vector<8x96xf32> to vector<8x32xf32>
    %68 = arith.mulf %67, %64 : vector<8x32xf32>
    %69 = arith.addf %66, %68 : vector<8x32xf32>
    %70 = vector.extract_strided_slice %62 {offsets = [0, 64], sizes = [8, 32], strides = [1, 1]} : vector<8x96xf32> to vector<8x32xf32>
    %71 = math.tanh %69 : vector<8x32xf32>
    %72 = arith.mulf %70, %71 : vector<8x32xf32>
    %c16 = arith.constant 16 : index
    %c0_22 = arith.constant 0 : index
    %73 = vector.load %arg14[%c16, %c0_22] : memref<64x32xf32, #tpu.memory_space<vmem>>, vector<8x32xf32>
    tpu.vector_store %arg14[%c16, %c0_22], %72 {strides = array<i32>} : memref<64x32xf32, #tpu.memory_space<vmem>>, vector<8x32xf32>,
    %74 = vector.extract_strided_slice %5 {offsets = [24, 0], sizes = [8, 128], strides = [1, 1]} : vector<64x128xf32> to vector<8x128xf32>
    %75 = arith.truncf %72 : vector<8x32xf32> to vector<8x32xbf16>
    %cst_23 = arith.constant dense<0.000000e+00> : vector<8x128xf32>
    %76 = tpu.matmul %75, %6, %cst_23 {dimension_numbers = #tpu.dot_dimension_numbers<[1], [0], [0], [1], [0, 0, 1, 1], [], []>} : vector<8x32xbf16>, vector<32x128xbf16>, vector<8x128xf32> -> vector<8x128xf32>
    %77 = arith.addf %74, %76 : vector<8x128xf32>
    %78 = vector.extract_strided_slice %77 {offsets = [0, 0], sizes = [8, 96], strides = [1, 1]} : vector<8x128xf32> to vector<8x96xf32>
    %79 = arith.negf %78 : vector<8x96xf32>
    %80 = math.exp %79 : vector<8x96xf32>
    %cst_24 = arith.constant 1.000000e+00 : f32
    %81 = vector.broadcast %cst_24 : f32 to vector<8x96xf32>
    %82 = arith.addf %81, %80 : vector<8x96xf32>
    %83 = arith.divf %81, %82 : vector<8x96xf32>
    %84 = vector.extract_strided_slice %77 {offsets = [0, 96], sizes = [8, 32], strides = [1, 1]} : vector<8x128xf32> to vector<8x32xf32>
    %85 = math.tanh %84 : vector<8x32xf32>
    %86 = vector.extract_strided_slice %83 {offsets = [0, 32], sizes = [8, 32], strides = [1, 1]} : vector<8x96xf32> to vector<8x32xf32>
    %87 = arith.mulf %86, %69 : vector<8x32xf32>
    %88 = vector.extract_strided_slice %83 {offsets = [0, 0], sizes = [8, 32], strides = [1, 1]} : vector<8x96xf32> to vector<8x32xf32>
    %89 = arith.mulf %88, %85 : vector<8x32xf32>
    %90 = arith.addf %87, %89 : vector<8x32xf32>
    %91 = vector.extract_strided_slice %83 {offsets = [0, 64], sizes = [8, 32], strides = [1, 1]} : vector<8x96xf32> to vector<8x32xf32>
    %92 = math.tanh %90 : vector<8x32xf32>
    %93 = arith.mulf %91, %92 : vector<8x32xf32>
    %c24 = arith.constant 24 : index
    %c0_25 = arith.constant 0 : index
    %94 = vector.load %arg14[%c24, %c0_25] : memref<64x32xf32, #tpu.memory_space<vmem>>, vector<8x32xf32>
    tpu.vector_store %arg14[%c24, %c0_25], %93 {strides = array<i32>} : memref<64x32xf32, #tpu.memory_space<vmem>>, vector<8x32xf32>,
    %95 = vector.extract_strided_slice %5 {offsets = [32, 0], sizes = [8, 128], strides = [1, 1]} : vector<64x128xf32> to vector<8x128xf32>
    %96 = arith.truncf %93 : vector<8x32xf32> to vector<8x32xbf16>
    %cst_26 = arith.constant dense<0.000000e+00> : vector<8x128xf32>
    %97 = tpu.matmul %96, %6, %cst_26 {dimension_numbers = #tpu.dot_dimension_numbers<[1], [0], [0], [1], [0, 0, 1, 1], [], []>} : vector<8x32xbf16>, vector<32x128xbf16>, vector<8x128xf32> -> vector<8x128xf32>
    %98 = arith.addf %95, %97 : vector<8x128xf32>
    %99 = vector.extract_strided_slice %98 {offsets = [0, 0], sizes = [8, 96], strides = [1, 1]} : vector<8x128xf32> to vector<8x96xf32>
    %100 = arith.negf %99 : vector<8x96xf32>
    %101 = math.exp %100 : vector<8x96xf32>
    %cst_27 = arith.constant 1.000000e+00 : f32
    %102 = vector.broadcast %cst_27 : f32 to vector<8x96xf32>
    %103 = arith.addf %102, %101 : vector<8x96xf32>
    %104 = arith.divf %102, %103 : vector<8x96xf32>
    %105 = vector.extract_strided_slice %98 {offsets = [0, 96], sizes = [8, 32], strides = [1, 1]} : vector<8x128xf32> to vector<8x32xf32>
    %106 = math.tanh %105 : vector<8x32xf32>
    %107 = vector.extract_strided_slice %104 {offsets = [0, 32], sizes = [8, 32], strides = [1, 1]} : vector<8x96xf32> to vector<8x32xf32>
    %108 = arith.mulf %107, %90 : vector<8x32xf32>
    %109 = vector.extract_strided_slice %104 {offsets = [0, 0], sizes = [8, 32], strides = [1, 1]} : vector<8x96xf32> to vector<8x32xf32>
    %110 = arith.mulf %109, %106 : vector<8x32xf32>
    %111 = arith.addf %108, %110 : vector<8x32xf32>
    %112 = vector.extract_strided_slice %104 {offsets = [0, 64], sizes = [8, 32], strides = [1, 1]} : vector<8x96xf32> to vector<8x32xf32>
    %113 = math.tanh %111 : vector<8x32xf32>
    %114 = arith.mulf %112, %113 : vector<8x32xf32>
    %c32 = arith.constant 32 : index
    %c0_28 = arith.constant 0 : index
    %115 = vector.load %arg14[%c32, %c0_28] : memref<64x32xf32, #tpu.memory_space<vmem>>, vector<8x32xf32>
    tpu.vector_store %arg14[%c32, %c0_28], %114 {strides = array<i32>} : memref<64x32xf32, #tpu.memory_space<vmem>>, vector<8x32xf32>,
    %116 = vector.extract_strided_slice %5 {offsets = [40, 0], sizes = [8, 128], strides = [1, 1]} : vector<64x128xf32> to vector<8x128xf32>
    %117 = arith.truncf %114 : vector<8x32xf32> to vector<8x32xbf16>
    %cst_29 = arith.constant dense<0.000000e+00> : vector<8x128xf32>
    %118 = tpu.matmul %117, %6, %cst_29 {dimension_numbers = #tpu.dot_dimension_numbers<[1], [0], [0], [1], [0, 0, 1, 1], [], []>} : vector<8x32xbf16>, vector<32x128xbf16>, vector<8x128xf32> -> vector<8x128xf32>
    %119 = arith.addf %116, %118 : vector<8x128xf32>
    %120 = vector.extract_strided_slice %119 {offsets = [0, 0], sizes = [8, 96], strides = [1, 1]} : vector<8x128xf32> to vector<8x96xf32>
    %121 = arith.negf %120 : vector<8x96xf32>
    %122 = math.exp %121 : vector<8x96xf32>
    %cst_30 = arith.constant 1.000000e+00 : f32
    %123 = vector.broadcast %cst_30 : f32 to vector<8x96xf32>
    %124 = arith.addf %123, %122 : vector<8x96xf32>
    %125 = arith.divf %123, %124 : vector<8x96xf32>
    %126 = vector.extract_strided_slice %119 {offsets = [0, 96], sizes = [8, 32], strides = [1, 1]} : vector<8x128xf32> to vector<8x32xf32>
    %127 = math.tanh %126 : vector<8x32xf32>
    %128 = vector.extract_strided_slice %125 {offsets = [0, 32], sizes = [8, 32], strides = [1, 1]} : vector<8x96xf32> to vector<8x32xf32>
    %129 = arith.mulf %128, %111 : vector<8x32xf32>
    %130 = vector.extract_strided_slice %125 {offsets = [0, 0], sizes = [8, 32], strides = [1, 1]} : vector<8x96xf32> to vector<8x32xf32>
    %131 = arith.mulf %130, %127 : vector<8x32xf32>
    %132 = arith.addf %129, %131 : vector<8x32xf32>
    %133 = vector.extract_strided_slice %125 {offsets = [0, 64], sizes = [8, 32], strides = [1, 1]} : vector<8x96xf32> to vector<8x32xf32>
    %134 = math.tanh %132 : vector<8x32xf32>
    %135 = arith.mulf %133, %134 : vector<8x32xf32>
    %c40 = arith.constant 40 : index
    %c0_31 = arith.constant 0 : index
    %136 = vector.load %arg14[%c40, %c0_31] : memref<64x32xf32, #tpu.memory_space<vmem>>, vector<8x32xf32>
    tpu.vector_store %arg14[%c40, %c0_31], %135 {strides = array<i32>} : memref<64x32xf32, #tpu.memory_space<vmem>>, vector<8x32xf32>,
    %137 = vector.extract_strided_slice %5 {offsets = [48, 0], sizes = [8, 128], strides = [1, 1]} : vector<64x128xf32> to vector<8x128xf32>
    %138 = arith.truncf %135 : vector<8x32xf32> to vector<8x32xbf16>
    %cst_32 = arith.constant dense<0.000000e+00> : vector<8x128xf32>
    %139 = tpu.matmul %138, %6, %cst_32 {dimension_numbers = #tpu.dot_dimension_numbers<[1], [0], [0], [1], [0, 0, 1, 1], [], []>} : vector<8x32xbf16>, vector<32x128xbf16>, vector<8x128xf32> -> vector<8x128xf32>
    %140 = arith.addf %137, %139 : vector<8x128xf32>
    %141 = vector.extract_strided_slice %140 {offsets = [0, 0], sizes = [8, 96], strides = [1, 1]} : vector<8x128xf32> to vector<8x96xf32>
    %142 = arith.negf %141 : vector<8x96xf32>
    %143 = math.exp %142 : vector<8x96xf32>
    %cst_33 = arith.constant 1.000000e+00 : f32
    %144 = vector.broadcast %cst_33 : f32 to vector<8x96xf32>
    %145 = arith.addf %144, %143 : vector<8x96xf32>
    %146 = arith.divf %144, %145 : vector<8x96xf32>
    %147 = vector.extract_strided_slice %140 {offsets = [0, 96], sizes = [8, 32], strides = [1, 1]} : vector<8x128xf32> to vector<8x32xf32>
    %148 = math.tanh %147 : vector<8x32xf32>
    %149 = vector.extract_strided_slice %146 {offsets = [0, 32], sizes = [8, 32], strides = [1, 1]} : vector<8x96xf32> to vector<8x32xf32>
    %150 = arith.mulf %149, %132 : vector<8x32xf32>
    %151 = vector.extract_strided_slice %146 {offsets = [0, 0], sizes = [8, 32], strides = [1, 1]} : vector<8x96xf32> to vector<8x32xf32>
    %152 = arith.mulf %151, %148 : vector<8x32xf32>
    %153 = arith.addf %150, %152 : vector<8x32xf32>
    %154 = vector.extract_strided_slice %146 {offsets = [0, 64], sizes = [8, 32], strides = [1, 1]} : vector<8x96xf32> to vector<8x32xf32>
    %155 = math.tanh %153 : vector<8x32xf32>
    %156 = arith.mulf %154, %155 : vector<8x32xf32>
    %c48 = arith.constant 48 : index
    %c0_34 = arith.constant 0 : index
    %157 = vector.load %arg14[%c48, %c0_34] : memref<64x32xf32, #tpu.memory_space<vmem>>, vector<8x32xf32>
    tpu.vector_store %arg14[%c48, %c0_34], %156 {strides = array<i32>} : memref<64x32xf32, #tpu.memory_space<vmem>>, vector<8x32xf32>,
    %158 = vector.extract_strided_slice %5 {offsets = [56, 0], sizes = [8, 128], strides = [1, 1]} : vector<64x128xf32> to vector<8x128xf32>
    %159 = arith.truncf %156 : vector<8x32xf32> to vector<8x32xbf16>
    %cst_35 = arith.constant dense<0.000000e+00> : vector<8x128xf32>
    %160 = tpu.matmul %159, %6, %cst_35 {dimension_numbers = #tpu.dot_dimension_numbers<[1], [0], [0], [1], [0, 0, 1, 1], [], []>} : vector<8x32xbf16>, vector<32x128xbf16>, vector<8x128xf32> -> vector<8x128xf32>
    %161 = arith.addf %158, %160 : vector<8x128xf32>
    %162 = vector.extract_strided_slice %161 {offsets = [0, 0], sizes = [8, 96], strides = [1, 1]} : vector<8x128xf32> to vector<8x96xf32>
    %163 = arith.negf %162 : vector<8x96xf32>
    %164 = math.exp %163 : vector<8x96xf32>
    %cst_36 = arith.constant 1.000000e+00 : f32
    %165 = vector.broadcast %cst_36 : f32 to vector<8x96xf32>
    %166 = arith.addf %165, %164 : vector<8x96xf32>
    %167 = arith.divf %165, %166 : vector<8x96xf32>
    %168 = vector.extract_strided_slice %161 {offsets = [0, 96], sizes = [8, 32], strides = [1, 1]} : vector<8x128xf32> to vector<8x32xf32>
    %169 = math.tanh %168 : vector<8x32xf32>
    %170 = vector.extract_strided_slice %167 {offsets = [0, 32], sizes = [8, 32], strides = [1, 1]} : vector<8x96xf32> to vector<8x32xf32>
    %171 = arith.mulf %170, %153 : vector<8x32xf32>
    %172 = vector.extract_strided_slice %167 {offsets = [0, 0], sizes = [8, 32], strides = [1, 1]} : vector<8x96xf32> to vector<8x32xf32>
    %173 = arith.mulf %172, %169 : vector<8x32xf32>
    %174 = arith.addf %171, %173 : vector<8x32xf32>
    %175 = vector.extract_strided_slice %167 {offsets = [0, 64], sizes = [8, 32], strides = [1, 1]} : vector<8x96xf32> to vector<8x32xf32>
    %176 = math.tanh %174 : vector<8x32xf32>
    %177 = arith.mulf %175, %176 : vector<8x32xf32>
    %c56 = arith.constant 56 : index
    %c0_37 = arith.constant 0 : index
    %178 = vector.load %arg14[%c56, %c0_37] : memref<64x32xf32, #tpu.memory_space<vmem>>, vector<8x32xf32>
    tpu.vector_store %arg14[%c56, %c0_37], %177 {strides = array<i32>} : memref<64x32xf32, #tpu.memory_space<vmem>>, vector<8x32xf32>,
    %c0_38 = arith.constant 0 : index
    %c0_39 = arith.constant 0 : index
    %c0_40 = arith.constant 0 : index
    %179 = vector.load %arg12[%c0_38, %c0_39, %c0_40] : memref<3x8x32xf32, #tpu.memory_space<vmem>>, vector<1x8x32xf32>
    %180 = vector.shape_cast %179 : vector<1x8x32xf32> to vector<8x32xf32>
    %181 = vector.shape_cast %177 : vector<8x32xf32> to vector<1x8x32xf32>
    tpu.vector_store %arg12[%c0_38, %c0_39, %c0_40], %181 {strides = array<i32>} : memref<3x8x32xf32, #tpu.memory_space<vmem>>, vector<1x8x32xf32>,
    %c0_41 = arith.constant 0 : index
    %c0_42 = arith.constant 0 : index
    %c0_43 = arith.constant 0 : index
    %182 = vector.load %arg13[%c0_41, %c0_42, %c0_43] : memref<3x8x32xf32, #tpu.memory_space<vmem>>, vector<1x8x32xf32>
    %183 = vector.shape_cast %182 : vector<1x8x32xf32> to vector<8x32xf32>
    %184 = vector.shape_cast %174 : vector<8x32xf32> to vector<1x8x32xf32>
    tpu.vector_store %arg13[%c0_41, %c0_42, %c0_43], %184 {strides = array<i32>} : memref<3x8x32xf32, #tpu.memory_space<vmem>>, vector<1x8x32xf32>,
    %c0_44 = arith.constant 0 : index
    %c0_45 = arith.constant 0 : index
    %185 = vector.load %arg14[%c0_44, %c0_45] : memref<64x32xf32, #tpu.memory_space<vmem>>, vector<64x32xf32>
    %186 = arith.truncf %185 : vector<64x32xf32> to vector<64x32xbf16>
    %c0_46 = arith.constant 0 : index
    %c0_47 = arith.constant 0 : index
    %c0_48 = arith.constant 0 : index
    %187 = vector.load %arg4[%c0_46, %c0_47, %c0_48] : memref<2x32x128xbf16, #tpu.memory_space<vmem>>, vector<1x32x128xbf16>
    %188 = vector.shape_cast %187 : vector<1x32x128xbf16> to vector<32x128xbf16>
    %cst_49 = arith.constant dense<0.000000e+00> : vector<64x128xf32>
    %189 = tpu.matmul %186, %188, %cst_49 {dimension_numbers = #tpu.dot_dimension_numbers<[1], [0], [0], [1], [0, 0, 1, 1], [], []>} : vector<64x32xbf16>, vector<32x128xbf16>, vector<64x128xf32> -> vector<64x128xf32>
    %c0_50 = arith.constant 0 : index
    %c0_51 = arith.constant 0 : index
    %c0_52 = arith.constant 0 : index
    %190 = vector.load %arg6[%c0_50, %c0_51, %c0_52] : memref<2x1x128xf32, #tpu.memory_space<vmem>>, vector<1x1x128xf32>
    %191 = vector.shape_cast %190 : vector<1x1x128xf32> to vector<1x128xf32>
    %192 = vector.broadcast %191 : vector<1x128xf32> to vector<64x128xf32>
    %193 = arith.addf %189, %192 : vector<64x128xf32>
    %c0_53 = arith.constant 0 : index
    %c0_54 = arith.constant 0 : index
    %c0_55 = arith.constant 0 : index
    %194 = vector.load %arg5[%c0_53, %c0_54, %c0_55] : memref<2x32x128xbf16, #tpu.memory_space<vmem>>, vector<1x32x128xbf16>
    %195 = vector.shape_cast %194 : vector<1x32x128xbf16> to vector<32x128xbf16>
    %c1 = arith.constant 1 : index
    %c0_56 = arith.constant 0 : index
    %c0_57 = arith.constant 0 : index
    %196 = vector.load %arg7[%c1, %c0_56, %c0_57] : memref<3x8x32xf32, #tpu.memory_space<vmem>>, vector<1x8x32xf32>
    %197 = vector.shape_cast %196 : vector<1x8x32xf32> to vector<8x32xf32>
    %c1_58 = arith.constant 1 : index
    %c0_59 = arith.constant 0 : index
    %c0_60 = arith.constant 0 : index
    %198 = vector.load %arg8[%c1_58, %c0_59, %c0_60] : memref<3x8x32xf32, #tpu.memory_space<vmem>>, vector<1x8x32xf32>
    %199 = vector.shape_cast %198 : vector<1x8x32xf32> to vector<8x32xf32>
    %200 = vector.extract_strided_slice %193 {offsets = [0, 0], sizes = [8, 128], strides = [1, 1]} : vector<64x128xf32> to vector<8x128xf32>
    %201 = arith.truncf %197 : vector<8x32xf32> to vector<8x32xbf16>
    %cst_61 = arith.constant dense<0.000000e+00> : vector<8x128xf32>
    %202 = tpu.matmul %201, %195, %cst_61 {dimension_numbers = #tpu.dot_dimension_numbers<[1], [0], [0], [1], [0, 0, 1, 1], [], []>} : vector<8x32xbf16>, vector<32x128xbf16>, vector<8x128xf32> -> vector<8x128xf32>
    %203 = arith.addf %200, %202 : vector<8x128xf32>
    %204 = vector.extract_strided_slice %203 {offsets = [0, 0], sizes = [8, 96], strides = [1, 1]} : vector<8x128xf32> to vector<8x96xf32>
    %205 = arith.negf %204 : vector<8x96xf32>
    %206 = math.exp %205 : vector<8x96xf32>
    %cst_62 = arith.constant 1.000000e+00 : f32
    %207 = vector.broadcast %cst_62 : f32 to vector<8x96xf32>
    %208 = arith.addf %207, %206 : vector<8x96xf32>
    %209 = arith.divf %207, %208 : vector<8x96xf32>
    %210 = vector.extract_strided_slice %203 {offsets = [0, 96], sizes = [8, 32], strides = [1, 1]} : vector<8x128xf32> to vector<8x32xf32>
    %211 = math.tanh %210 : vector<8x32xf32>
    %212 = vector.extract_strided_slice %209 {offsets = [0, 32], sizes = [8, 32], strides = [1, 1]} : vector<8x96xf32> to vector<8x32xf32>
    %213 = arith.mulf %212, %199 : vector<8x32xf32>
    %214 = vector.extract_strided_slice %209 {offsets = [0, 0], sizes = [8, 32], strides = [1, 1]} : vector<8x96xf32> to vector<8x32xf32>
    %215 = arith.mulf %214, %211 : vector<8x32xf32>
    %216 = arith.addf %213, %215 : vector<8x32xf32>
    %217 = vector.extract_strided_slice %209 {offsets = [0, 64], sizes = [8, 32], strides = [1, 1]} : vector<8x96xf32> to vector<8x32xf32>
    %218 = math.tanh %216 : vector<8x32xf32>
    %219 = arith.mulf %217, %218 : vector<8x32xf32>
    %c0_63 = arith.constant 0 : index
    %c0_64 = arith.constant 0 : index
    %220 = vector.load %arg14[%c0_63, %c0_64] : memref<64x32xf32, #tpu.memory_space<vmem>>, vector<8x32xf32>
    tpu.vector_store %arg14[%c0_63, %c0_64], %219 {strides = array<i32>} : memref<64x32xf32, #tpu.memory_space<vmem>>, vector<8x32xf32>,
    %221 = vector.extract_strided_slice %193 {offsets = [8, 0], sizes = [8, 128], strides = [1, 1]} : vector<64x128xf32> to vector<8x128xf32>
    %222 = arith.truncf %219 : vector<8x32xf32> to vector<8x32xbf16>
    %cst_65 = arith.constant dense<0.000000e+00> : vector<8x128xf32>
    %223 = tpu.matmul %222, %195, %cst_65 {dimension_numbers = #tpu.dot_dimension_numbers<[1], [0], [0], [1], [0, 0, 1, 1], [], []>} : vector<8x32xbf16>, vector<32x128xbf16>, vector<8x128xf32> -> vector<8x128xf32>
    %224 = arith.addf %221, %223 : vector<8x128xf32>
    %225 = vector.extract_strided_slice %224 {offsets = [0, 0], sizes = [8, 96], strides = [1, 1]} : vector<8x128xf32> to vector<8x96xf32>
    %226 = arith.negf %225 : vector<8x96xf32>
    %227 = math.exp %226 : vector<8x96xf32>
    %cst_66 = arith.constant 1.000000e+00 : f32
    %228 = vector.broadcast %cst_66 : f32 to vector<8x96xf32>
    %229 = arith.addf %228, %227 : vector<8x96xf32>
    %230 = arith.divf %228, %229 : vector<8x96xf32>
    %231 = vector.extract_strided_slice %224 {offsets = [0, 96], sizes = [8, 32], strides = [1, 1]} : vector<8x128xf32> to vector<8x32xf32>
    %232 = math.tanh %231 : vector<8x32xf32>
    %233 = vector.extract_strided_slice %230 {offsets = [0, 32], sizes = [8, 32], strides = [1, 1]} : vector<8x96xf32> to vector<8x32xf32>
    %234 = arith.mulf %233, %216 : vector<8x32xf32>
    %235 = vector.extract_strided_slice %230 {offsets = [0, 0], sizes = [8, 32], strides = [1, 1]} : vector<8x96xf32> to vector<8x32xf32>
    %236 = arith.mulf %235, %232 : vector<8x32xf32>
    %237 = arith.addf %234, %236 : vector<8x32xf32>
    %238 = vector.extract_strided_slice %230 {offsets = [0, 64], sizes = [8, 32], strides = [1, 1]} : vector<8x96xf32> to vector<8x32xf32>
    %239 = math.tanh %237 : vector<8x32xf32>
    %240 = arith.mulf %238, %239 : vector<8x32xf32>
    %c8_67 = arith.constant 8 : index
    %c0_68 = arith.constant 0 : index
    %241 = vector.load %arg14[%c8_67, %c0_68] : memref<64x32xf32, #tpu.memory_space<vmem>>, vector<8x32xf32>
    tpu.vector_store %arg14[%c8_67, %c0_68], %240 {strides = array<i32>} : memref<64x32xf32, #tpu.memory_space<vmem>>, vector<8x32xf32>,
    %242 = vector.extract_strided_slice %193 {offsets = [16, 0], sizes = [8, 128], strides = [1, 1]} : vector<64x128xf32> to vector<8x128xf32>
    %243 = arith.truncf %240 : vector<8x32xf32> to vector<8x32xbf16>
    %cst_69 = arith.constant dense<0.000000e+00> : vector<8x128xf32>
    %244 = tpu.matmul %243, %195, %cst_69 {dimension_numbers = #tpu.dot_dimension_numbers<[1], [0], [0], [1], [0, 0, 1, 1], [], []>} : vector<8x32xbf16>, vector<32x128xbf16>, vector<8x128xf32> -> vector<8x128xf32>
    %245 = arith.addf %242, %244 : vector<8x128xf32>
    %246 = vector.extract_strided_slice %245 {offsets = [0, 0], sizes = [8, 96], strides = [1, 1]} : vector<8x128xf32> to vector<8x96xf32>
    %247 = arith.negf %246 : vector<8x96xf32>
    %248 = math.exp %247 : vector<8x96xf32>
    %cst_70 = arith.constant 1.000000e+00 : f32
    %249 = vector.broadcast %cst_70 : f32 to vector<8x96xf32>
    %250 = arith.addf %249, %248 : vector<8x96xf32>
    %251 = arith.divf %249, %250 : vector<8x96xf32>
    %252 = vector.extract_strided_slice %245 {offsets = [0, 96], sizes = [8, 32], strides = [1, 1]} : vector<8x128xf32> to vector<8x32xf32>
    %253 = math.tanh %252 : vector<8x32xf32>
    %254 = vector.extract_strided_slice %251 {offsets = [0, 32], sizes = [8, 32], strides = [1, 1]} : vector<8x96xf32> to vector<8x32xf32>
    %255 = arith.mulf %254, %237 : vector<8x32xf32>
    %256 = vector.extract_strided_slice %251 {offsets = [0, 0], sizes = [8, 32], strides = [1, 1]} : vector<8x96xf32> to vector<8x32xf32>
    %257 = arith.mulf %256, %253 : vector<8x32xf32>
    %258 = arith.addf %255, %257 : vector<8x32xf32>
    %259 = vector.extract_strided_slice %251 {offsets = [0, 64], sizes = [8, 32], strides = [1, 1]} : vector<8x96xf32> to vector<8x32xf32>
    %260 = math.tanh %258 : vector<8x32xf32>
    %261 = arith.mulf %259, %260 : vector<8x32xf32>
    %c16_71 = arith.constant 16 : index
    %c0_72 = arith.constant 0 : index
    %262 = vector.load %arg14[%c16_71, %c0_72] : memref<64x32xf32, #tpu.memory_space<vmem>>, vector<8x32xf32>
    tpu.vector_store %arg14[%c16_71, %c0_72], %261 {strides = array<i32>} : memref<64x32xf32, #tpu.memory_space<vmem>>, vector<8x32xf32>,
    %263 = vector.extract_strided_slice %193 {offsets = [24, 0], sizes = [8, 128], strides = [1, 1]} : vector<64x128xf32> to vector<8x128xf32>
    %264 = arith.truncf %261 : vector<8x32xf32> to vector<8x32xbf16>
    %cst_73 = arith.constant dense<0.000000e+00> : vector<8x128xf32>
    %265 = tpu.matmul %264, %195, %cst_73 {dimension_numbers = #tpu.dot_dimension_numbers<[1], [0], [0], [1], [0, 0, 1, 1], [], []>} : vector<8x32xbf16>, vector<32x128xbf16>, vector<8x128xf32> -> vector<8x128xf32>
    %266 = arith.addf %263, %265 : vector<8x128xf32>
    %267 = vector.extract_strided_slice %266 {offsets = [0, 0], sizes = [8, 96], strides = [1, 1]} : vector<8x128xf32> to vector<8x96xf32>
    %268 = arith.negf %267 : vector<8x96xf32>
    %269 = math.exp %268 : vector<8x96xf32>
    %cst_74 = arith.constant 1.000000e+00 : f32
    %270 = vector.broadcast %cst_74 : f32 to vector<8x96xf32>
    %271 = arith.addf %270, %269 : vector<8x96xf32>
    %272 = arith.divf %270, %271 : vector<8x96xf32>
    %273 = vector.extract_strided_slice %266 {offsets = [0, 96], sizes = [8, 32], strides = [1, 1]} : vector<8x128xf32> to vector<8x32xf32>
    %274 = math.tanh %273 : vector<8x32xf32>
    %275 = vector.extract_strided_slice %272 {offsets = [0, 32], sizes = [8, 32], strides = [1, 1]} : vector<8x96xf32> to vector<8x32xf32>
    %276 = arith.mulf %275, %258 : vector<8x32xf32>
    %277 = vector.extract_strided_slice %272 {offsets = [0, 0], sizes = [8, 32], strides = [1, 1]} : vector<8x96xf32> to vector<8x32xf32>
    %278 = arith.mulf %277, %274 : vector<8x32xf32>
    %279 = arith.addf %276, %278 : vector<8x32xf32>
    %280 = vector.extract_strided_slice %272 {offsets = [0, 64], sizes = [8, 32], strides = [1, 1]} : vector<8x96xf32> to vector<8x32xf32>
    %281 = math.tanh %279 : vector<8x32xf32>
    %282 = arith.mulf %280, %281 : vector<8x32xf32>
    %c24_75 = arith.constant 24 : index
    %c0_76 = arith.constant 0 : index
    %283 = vector.load %arg14[%c24_75, %c0_76] : memref<64x32xf32, #tpu.memory_space<vmem>>, vector<8x32xf32>
    tpu.vector_store %arg14[%c24_75, %c0_76], %282 {strides = array<i32>} : memref<64x32xf32, #tpu.memory_space<vmem>>, vector<8x32xf32>,
    %284 = vector.extract_strided_slice %193 {offsets = [32, 0], sizes = [8, 128], strides = [1, 1]} : vector<64x128xf32> to vector<8x128xf32>
    %285 = arith.truncf %282 : vector<8x32xf32> to vector<8x32xbf16>
    %cst_77 = arith.constant dense<0.000000e+00> : vector<8x128xf32>
    %286 = tpu.matmul %285, %195, %cst_77 {dimension_numbers = #tpu.dot_dimension_numbers<[1], [0], [0], [1], [0, 0, 1, 1], [], []>} : vector<8x32xbf16>, vector<32x128xbf16>, vector<8x128xf32> -> vector<8x128xf32>
    %287 = arith.addf %284, %286 : vector<8x128xf32>
    %288 = vector.extract_strided_slice %287 {offsets = [0, 0], sizes = [8, 96], strides = [1, 1]} : vector<8x128xf32> to vector<8x96xf32>
    %289 = arith.negf %288 : vector<8x96xf32>
    %290 = math.exp %289 : vector<8x96xf32>
    %cst_78 = arith.constant 1.000000e+00 : f32
    %291 = vector.broadcast %cst_78 : f32 to vector<8x96xf32>
    %292 = arith.addf %291, %290 : vector<8x96xf32>
    %293 = arith.divf %291, %292 : vector<8x96xf32>
    %294 = vector.extract_strided_slice %287 {offsets = [0, 96], sizes = [8, 32], strides = [1, 1]} : vector<8x128xf32> to vector<8x32xf32>
    %295 = math.tanh %294 : vector<8x32xf32>
    %296 = vector.extract_strided_slice %293 {offsets = [0, 32], sizes = [8, 32], strides = [1, 1]} : vector<8x96xf32> to vector<8x32xf32>
    %297 = arith.mulf %296, %279 : vector<8x32xf32>
    %298 = vector.extract_strided_slice %293 {offsets = [0, 0], sizes = [8, 32], strides = [1, 1]} : vector<8x96xf32> to vector<8x32xf32>
    %299 = arith.mulf %298, %295 : vector<8x32xf32>
    %300 = arith.addf %297, %299 : vector<8x32xf32>
    %301 = vector.extract_strided_slice %293 {offsets = [0, 64], sizes = [8, 32], strides = [1, 1]} : vector<8x96xf32> to vector<8x32xf32>
    %302 = math.tanh %300 : vector<8x32xf32>
    %303 = arith.mulf %301, %302 : vector<8x32xf32>
    %c32_79 = arith.constant 32 : index
    %c0_80 = arith.constant 0 : index
    %304 = vector.load %arg14[%c32_79, %c0_80] : memref<64x32xf32, #tpu.memory_space<vmem>>, vector<8x32xf32>
    tpu.vector_store %arg14[%c32_79, %c0_80], %303 {strides = array<i32>} : memref<64x32xf32, #tpu.memory_space<vmem>>, vector<8x32xf32>,
    %305 = vector.extract_strided_slice %193 {offsets = [40, 0], sizes = [8, 128], strides = [1, 1]} : vector<64x128xf32> to vector<8x128xf32>
    %306 = arith.truncf %303 : vector<8x32xf32> to vector<8x32xbf16>
    %cst_81 = arith.constant dense<0.000000e+00> : vector<8x128xf32>
    %307 = tpu.matmul %306, %195, %cst_81 {dimension_numbers = #tpu.dot_dimension_numbers<[1], [0], [0], [1], [0, 0, 1, 1], [], []>} : vector<8x32xbf16>, vector<32x128xbf16>, vector<8x128xf32> -> vector<8x128xf32>
    %308 = arith.addf %305, %307 : vector<8x128xf32>
    %309 = vector.extract_strided_slice %308 {offsets = [0, 0], sizes = [8, 96], strides = [1, 1]} : vector<8x128xf32> to vector<8x96xf32>
    %310 = arith.negf %309 : vector<8x96xf32>
    %311 = math.exp %310 : vector<8x96xf32>
    %cst_82 = arith.constant 1.000000e+00 : f32
    %312 = vector.broadcast %cst_82 : f32 to vector<8x96xf32>
    %313 = arith.addf %312, %311 : vector<8x96xf32>
    %314 = arith.divf %312, %313 : vector<8x96xf32>
    %315 = vector.extract_strided_slice %308 {offsets = [0, 96], sizes = [8, 32], strides = [1, 1]} : vector<8x128xf32> to vector<8x32xf32>
    %316 = math.tanh %315 : vector<8x32xf32>
    %317 = vector.extract_strided_slice %314 {offsets = [0, 32], sizes = [8, 32], strides = [1, 1]} : vector<8x96xf32> to vector<8x32xf32>
    %318 = arith.mulf %317, %300 : vector<8x32xf32>
    %319 = vector.extract_strided_slice %314 {offsets = [0, 0], sizes = [8, 32], strides = [1, 1]} : vector<8x96xf32> to vector<8x32xf32>
    %320 = arith.mulf %319, %316 : vector<8x32xf32>
    %321 = arith.addf %318, %320 : vector<8x32xf32>
    %322 = vector.extract_strided_slice %314 {offsets = [0, 64], sizes = [8, 32], strides = [1, 1]} : vector<8x96xf32> to vector<8x32xf32>
    %323 = math.tanh %321 : vector<8x32xf32>
    %324 = arith.mulf %322, %323 : vector<8x32xf32>
    %c40_83 = arith.constant 40 : index
    %c0_84 = arith.constant 0 : index
    %325 = vector.load %arg14[%c40_83, %c0_84] : memref<64x32xf32, #tpu.memory_space<vmem>>, vector<8x32xf32>
    tpu.vector_store %arg14[%c40_83, %c0_84], %324 {strides = array<i32>} : memref<64x32xf32, #tpu.memory_space<vmem>>, vector<8x32xf32>,
    %326 = vector.extract_strided_slice %193 {offsets = [48, 0], sizes = [8, 128], strides = [1, 1]} : vector<64x128xf32> to vector<8x128xf32>
    %327 = arith.truncf %324 : vector<8x32xf32> to vector<8x32xbf16>
    %cst_85 = arith.constant dense<0.000000e+00> : vector<8x128xf32>
    %328 = tpu.matmul %327, %195, %cst_85 {dimension_numbers = #tpu.dot_dimension_numbers<[1], [0], [0], [1], [0, 0, 1, 1], [], []>} : vector<8x32xbf16>, vector<32x128xbf16>, vector<8x128xf32> -> vector<8x128xf32>
    %329 = arith.addf %326, %328 : vector<8x128xf32>
    %330 = vector.extract_strided_slice %329 {offsets = [0, 0], sizes = [8, 96], strides = [1, 1]} : vector<8x128xf32> to vector<8x96xf32>
    %331 = arith.negf %330 : vector<8x96xf32>
    %332 = math.exp %331 : vector<8x96xf32>
    %cst_86 = arith.constant 1.000000e+00 : f32
    %333 = vector.broadcast %cst_86 : f32 to vector<8x96xf32>
    %334 = arith.addf %333, %332 : vector<8x96xf32>
    %335 = arith.divf %333, %334 : vector<8x96xf32>
    %336 = vector.extract_strided_slice %329 {offsets = [0, 96], sizes = [8, 32], strides = [1, 1]} : vector<8x128xf32> to vector<8x32xf32>
    %337 = math.tanh %336 : vector<8x32xf32>
    %338 = vector.extract_strided_slice %335 {offsets = [0, 32], sizes = [8, 32], strides = [1, 1]} : vector<8x96xf32> to vector<8x32xf32>
    %339 = arith.mulf %338, %321 : vector<8x32xf32>
    %340 = vector.extract_strided_slice %335 {offsets = [0, 0], sizes = [8, 32], strides = [1, 1]} : vector<8x96xf32> to vector<8x32xf32>
    %341 = arith.mulf %340, %337 : vector<8x32xf32>
    %342 = arith.addf %339, %341 : vector<8x32xf32>
    %343 = vector.extract_strided_slice %335 {offsets = [0, 64], sizes = [8, 32], strides = [1, 1]} : vector<8x96xf32> to vector<8x32xf32>
    %344 = math.tanh %342 : vector<8x32xf32>
    %345 = arith.mulf %343, %344 : vector<8x32xf32>
    %c48_87 = arith.constant 48 : index
    %c0_88 = arith.constant 0 : index
    %346 = vector.load %arg14[%c48_87, %c0_88] : memref<64x32xf32, #tpu.memory_space<vmem>>, vector<8x32xf32>
    tpu.vector_store %arg14[%c48_87, %c0_88], %345 {strides = array<i32>} : memref<64x32xf32, #tpu.memory_space<vmem>>, vector<8x32xf32>,
    %347 = vector.extract_strided_slice %193 {offsets = [56, 0], sizes = [8, 128], strides = [1, 1]} : vector<64x128xf32> to vector<8x128xf32>
    %348 = arith.truncf %345 : vector<8x32xf32> to vector<8x32xbf16>
    %cst_89 = arith.constant dense<0.000000e+00> : vector<8x128xf32>
    %349 = tpu.matmul %348, %195, %cst_89 {dimension_numbers = #tpu.dot_dimension_numbers<[1], [0], [0], [1], [0, 0, 1, 1], [], []>} : vector<8x32xbf16>, vector<32x128xbf16>, vector<8x128xf32> -> vector<8x128xf32>
    %350 = arith.addf %347, %349 : vector<8x128xf32>
    %351 = vector.extract_strided_slice %350 {offsets = [0, 0], sizes = [8, 96], strides = [1, 1]} : vector<8x128xf32> to vector<8x96xf32>
    %352 = arith.negf %351 : vector<8x96xf32>
    %353 = math.exp %352 : vector<8x96xf32>
    %cst_90 = arith.constant 1.000000e+00 : f32
    %354 = vector.broadcast %cst_90 : f32 to vector<8x96xf32>
    %355 = arith.addf %354, %353 : vector<8x96xf32>
    %356 = arith.divf %354, %355 : vector<8x96xf32>
    %357 = vector.extract_strided_slice %350 {offsets = [0, 96], sizes = [8, 32], strides = [1, 1]} : vector<8x128xf32> to vector<8x32xf32>
    %358 = math.tanh %357 : vector<8x32xf32>
    %359 = vector.extract_strided_slice %356 {offsets = [0, 32], sizes = [8, 32], strides = [1, 1]} : vector<8x96xf32> to vector<8x32xf32>
    %360 = arith.mulf %359, %342 : vector<8x32xf32>
    %361 = vector.extract_strided_slice %356 {offsets = [0, 0], sizes = [8, 32], strides = [1, 1]} : vector<8x96xf32> to vector<8x32xf32>
    %362 = arith.mulf %361, %358 : vector<8x32xf32>
    %363 = arith.addf %360, %362 : vector<8x32xf32>
    %364 = vector.extract_strided_slice %356 {offsets = [0, 64], sizes = [8, 32], strides = [1, 1]} : vector<8x96xf32> to vector<8x32xf32>
    %365 = math.tanh %363 : vector<8x32xf32>
    %366 = arith.mulf %364, %365 : vector<8x32xf32>
    %c56_91 = arith.constant 56 : index
    %c0_92 = arith.constant 0 : index
    %367 = vector.load %arg14[%c56_91, %c0_92] : memref<64x32xf32, #tpu.memory_space<vmem>>, vector<8x32xf32>
    tpu.vector_store %arg14[%c56_91, %c0_92], %366 {strides = array<i32>} : memref<64x32xf32, #tpu.memory_space<vmem>>, vector<8x32xf32>,
    %c1_93 = arith.constant 1 : index
    %c0_94 = arith.constant 0 : index
    %c0_95 = arith.constant 0 : index
    %368 = vector.load %arg12[%c1_93, %c0_94, %c0_95] : memref<3x8x32xf32, #tpu.memory_space<vmem>>, vector<1x8x32xf32>
    %369 = vector.shape_cast %368 : vector<1x8x32xf32> to vector<8x32xf32>
    %370 = vector.shape_cast %366 : vector<8x32xf32> to vector<1x8x32xf32>
    tpu.vector_store %arg12[%c1_93, %c0_94, %c0_95], %370 {strides = array<i32>} : memref<3x8x32xf32, #tpu.memory_space<vmem>>, vector<1x8x32xf32>,
    %c1_96 = arith.constant 1 : index
    %c0_97 = arith.constant 0 : index
    %c0_98 = arith.constant 0 : index
    %371 = vector.load %arg13[%c1_96, %c0_97, %c0_98] : memref<3x8x32xf32, #tpu.memory_space<vmem>>, vector<1x8x32xf32>
    %372 = vector.shape_cast %371 : vector<1x8x32xf32> to vector<8x32xf32>
    %373 = vector.shape_cast %363 : vector<8x32xf32> to vector<1x8x32xf32>
    tpu.vector_store %arg13[%c1_96, %c0_97, %c0_98], %373 {strides = array<i32>} : memref<3x8x32xf32, #tpu.memory_space<vmem>>, vector<1x8x32xf32>,
    %c0_99 = arith.constant 0 : index
    %c0_100 = arith.constant 0 : index
    %374 = vector.load %arg14[%c0_99, %c0_100] : memref<64x32xf32, #tpu.memory_space<vmem>>, vector<64x32xf32>
    %375 = arith.truncf %374 : vector<64x32xf32> to vector<64x32xbf16>
    %c1_101 = arith.constant 1 : index
    %c0_102 = arith.constant 0 : index
    %c0_103 = arith.constant 0 : index
    %376 = vector.load %arg4[%c1_101, %c0_102, %c0_103] : memref<2x32x128xbf16, #tpu.memory_space<vmem>>, vector<1x32x128xbf16>
    %377 = vector.shape_cast %376 : vector<1x32x128xbf16> to vector<32x128xbf16>
    %cst_104 = arith.constant dense<0.000000e+00> : vector<64x128xf32>
    %378 = tpu.matmul %375, %377, %cst_104 {dimension_numbers = #tpu.dot_dimension_numbers<[1], [0], [0], [1], [0, 0, 1, 1], [], []>} : vector<64x32xbf16>, vector<32x128xbf16>, vector<64x128xf32> -> vector<64x128xf32>
    %c1_105 = arith.constant 1 : index
    %c0_106 = arith.constant 0 : index
    %c0_107 = arith.constant 0 : index
    %379 = vector.load %arg6[%c1_105, %c0_106, %c0_107] : memref<2x1x128xf32, #tpu.memory_space<vmem>>, vector<1x1x128xf32>
    %380 = vector.shape_cast %379 : vector<1x1x128xf32> to vector<1x128xf32>
    %381 = vector.broadcast %380 : vector<1x128xf32> to vector<64x128xf32>
    %382 = arith.addf %378, %381 : vector<64x128xf32>
    %c1_108 = arith.constant 1 : index
    %c0_109 = arith.constant 0 : index
    %c0_110 = arith.constant 0 : index
    %383 = vector.load %arg5[%c1_108, %c0_109, %c0_110] : memref<2x32x128xbf16, #tpu.memory_space<vmem>>, vector<1x32x128xbf16>
    %384 = vector.shape_cast %383 : vector<1x32x128xbf16> to vector<32x128xbf16>
    %c2 = arith.constant 2 : index
    %c0_111 = arith.constant 0 : index
    %c0_112 = arith.constant 0 : index
    %385 = vector.load %arg7[%c2, %c0_111, %c0_112] : memref<3x8x32xf32, #tpu.memory_space<vmem>>, vector<1x8x32xf32>
    %386 = vector.shape_cast %385 : vector<1x8x32xf32> to vector<8x32xf32>
    %c2_113 = arith.constant 2 : index
    %c0_114 = arith.constant 0 : index
    %c0_115 = arith.constant 0 : index
    %387 = vector.load %arg8[%c2_113, %c0_114, %c0_115] : memref<3x8x32xf32, #tpu.memory_space<vmem>>, vector<1x8x32xf32>
    %388 = vector.shape_cast %387 : vector<1x8x32xf32> to vector<8x32xf32>
    %389 = vector.extract_strided_slice %382 {offsets = [0, 0], sizes = [8, 128], strides = [1, 1]} : vector<64x128xf32> to vector<8x128xf32>
    %390 = arith.truncf %386 : vector<8x32xf32> to vector<8x32xbf16>
    %cst_116 = arith.constant dense<0.000000e+00> : vector<8x128xf32>
    %391 = tpu.matmul %390, %384, %cst_116 {dimension_numbers = #tpu.dot_dimension_numbers<[1], [0], [0], [1], [0, 0, 1, 1], [], []>} : vector<8x32xbf16>, vector<32x128xbf16>, vector<8x128xf32> -> vector<8x128xf32>
    %392 = arith.addf %389, %391 : vector<8x128xf32>
    %393 = vector.extract_strided_slice %392 {offsets = [0, 0], sizes = [8, 96], strides = [1, 1]} : vector<8x128xf32> to vector<8x96xf32>
    %394 = arith.negf %393 : vector<8x96xf32>
    %395 = math.exp %394 : vector<8x96xf32>
    %cst_117 = arith.constant 1.000000e+00 : f32
    %396 = vector.broadcast %cst_117 : f32 to vector<8x96xf32>
    %397 = arith.addf %396, %395 : vector<8x96xf32>
    %398 = arith.divf %396, %397 : vector<8x96xf32>
    %399 = vector.extract_strided_slice %392 {offsets = [0, 96], sizes = [8, 32], strides = [1, 1]} : vector<8x128xf32> to vector<8x32xf32>
    %400 = math.tanh %399 : vector<8x32xf32>
    %401 = vector.extract_strided_slice %398 {offsets = [0, 32], sizes = [8, 32], strides = [1, 1]} : vector<8x96xf32> to vector<8x32xf32>
    %402 = arith.mulf %401, %388 : vector<8x32xf32>
    %403 = vector.extract_strided_slice %398 {offsets = [0, 0], sizes = [8, 32], strides = [1, 1]} : vector<8x96xf32> to vector<8x32xf32>
    %404 = arith.mulf %403, %400 : vector<8x32xf32>
    %405 = arith.addf %402, %404 : vector<8x32xf32>
    %406 = vector.extract_strided_slice %398 {offsets = [0, 64], sizes = [8, 32], strides = [1, 1]} : vector<8x96xf32> to vector<8x32xf32>
    %407 = math.tanh %405 : vector<8x32xf32>
    %408 = arith.mulf %406, %407 : vector<8x32xf32>
    %409 = vector.extract_strided_slice %382 {offsets = [8, 0], sizes = [8, 128], strides = [1, 1]} : vector<64x128xf32> to vector<8x128xf32>
    %410 = arith.truncf %408 : vector<8x32xf32> to vector<8x32xbf16>
    %cst_118 = arith.constant dense<0.000000e+00> : vector<8x128xf32>
    %411 = tpu.matmul %410, %384, %cst_118 {dimension_numbers = #tpu.dot_dimension_numbers<[1], [0], [0], [1], [0, 0, 1, 1], [], []>} : vector<8x32xbf16>, vector<32x128xbf16>, vector<8x128xf32> -> vector<8x128xf32>
    %412 = arith.addf %409, %411 : vector<8x128xf32>
    %413 = vector.extract_strided_slice %412 {offsets = [0, 0], sizes = [8, 96], strides = [1, 1]} : vector<8x128xf32> to vector<8x96xf32>
    %414 = arith.negf %413 : vector<8x96xf32>
    %415 = math.exp %414 : vector<8x96xf32>
    %cst_119 = arith.constant 1.000000e+00 : f32
    %416 = vector.broadcast %cst_119 : f32 to vector<8x96xf32>
    %417 = arith.addf %416, %415 : vector<8x96xf32>
    %418 = arith.divf %416, %417 : vector<8x96xf32>
    %419 = vector.extract_strided_slice %412 {offsets = [0, 96], sizes = [8, 32], strides = [1, 1]} : vector<8x128xf32> to vector<8x32xf32>
    %420 = math.tanh %419 : vector<8x32xf32>
    %421 = vector.extract_strided_slice %418 {offsets = [0, 32], sizes = [8, 32], strides = [1, 1]} : vector<8x96xf32> to vector<8x32xf32>
    %422 = arith.mulf %421, %405 : vector<8x32xf32>
    %423 = vector.extract_strided_slice %418 {offsets = [0, 0], sizes = [8, 32], strides = [1, 1]} : vector<8x96xf32> to vector<8x32xf32>
    %424 = arith.mulf %423, %420 : vector<8x32xf32>
    %425 = arith.addf %422, %424 : vector<8x32xf32>
    %426 = vector.extract_strided_slice %418 {offsets = [0, 64], sizes = [8, 32], strides = [1, 1]} : vector<8x96xf32> to vector<8x32xf32>
    %427 = math.tanh %425 : vector<8x32xf32>
    %428 = arith.mulf %426, %427 : vector<8x32xf32>
    %429 = vector.extract_strided_slice %382 {offsets = [16, 0], sizes = [8, 128], strides = [1, 1]} : vector<64x128xf32> to vector<8x128xf32>
    %430 = arith.truncf %428 : vector<8x32xf32> to vector<8x32xbf16>
    %cst_120 = arith.constant dense<0.000000e+00> : vector<8x128xf32>
    %431 = tpu.matmul %430, %384, %cst_120 {dimension_numbers = #tpu.dot_dimension_numbers<[1], [0], [0], [1], [0, 0, 1, 1], [], []>} : vector<8x32xbf16>, vector<32x128xbf16>, vector<8x128xf32> -> vector<8x128xf32>
    %432 = arith.addf %429, %431 : vector<8x128xf32>
    %433 = vector.extract_strided_slice %432 {offsets = [0, 0], sizes = [8, 96], strides = [1, 1]} : vector<8x128xf32> to vector<8x96xf32>
    %434 = arith.negf %433 : vector<8x96xf32>
    %435 = math.exp %434 : vector<8x96xf32>
    %cst_121 = arith.constant 1.000000e+00 : f32
    %436 = vector.broadcast %cst_121 : f32 to vector<8x96xf32>
    %437 = arith.addf %436, %435 : vector<8x96xf32>
    %438 = arith.divf %436, %437 : vector<8x96xf32>
    %439 = vector.extract_strided_slice %432 {offsets = [0, 96], sizes = [8, 32], strides = [1, 1]} : vector<8x128xf32> to vector<8x32xf32>
    %440 = math.tanh %439 : vector<8x32xf32>
    %441 = vector.extract_strided_slice %438 {offsets = [0, 32], sizes = [8, 32], strides = [1, 1]} : vector<8x96xf32> to vector<8x32xf32>
    %442 = arith.mulf %441, %425 : vector<8x32xf32>
    %443 = vector.extract_strided_slice %438 {offsets = [0, 0], sizes = [8, 32], strides = [1, 1]} : vector<8x96xf32> to vector<8x32xf32>
    %444 = arith.mulf %443, %440 : vector<8x32xf32>
    %445 = arith.addf %442, %444 : vector<8x32xf32>
    %446 = vector.extract_strided_slice %438 {offsets = [0, 64], sizes = [8, 32], strides = [1, 1]} : vector<8x96xf32> to vector<8x32xf32>
    %447 = math.tanh %445 : vector<8x32xf32>
    %448 = arith.mulf %446, %447 : vector<8x32xf32>
    %449 = vector.extract_strided_slice %382 {offsets = [24, 0], sizes = [8, 128], strides = [1, 1]} : vector<64x128xf32> to vector<8x128xf32>
    %450 = arith.truncf %448 : vector<8x32xf32> to vector<8x32xbf16>
    %cst_122 = arith.constant dense<0.000000e+00> : vector<8x128xf32>
    %451 = tpu.matmul %450, %384, %cst_122 {dimension_numbers = #tpu.dot_dimension_numbers<[1], [0], [0], [1], [0, 0, 1, 1], [], []>} : vector<8x32xbf16>, vector<32x128xbf16>, vector<8x128xf32> -> vector<8x128xf32>
    %452 = arith.addf %449, %451 : vector<8x128xf32>
    %453 = vector.extract_strided_slice %452 {offsets = [0, 0], sizes = [8, 96], strides = [1, 1]} : vector<8x128xf32> to vector<8x96xf32>
    %454 = arith.negf %453 : vector<8x96xf32>
    %455 = math.exp %454 : vector<8x96xf32>
    %cst_123 = arith.constant 1.000000e+00 : f32
    %456 = vector.broadcast %cst_123 : f32 to vector<8x96xf32>
    %457 = arith.addf %456, %455 : vector<8x96xf32>
    %458 = arith.divf %456, %457 : vector<8x96xf32>
    %459 = vector.extract_strided_slice %452 {offsets = [0, 96], sizes = [8, 32], strides = [1, 1]} : vector<8x128xf32> to vector<8x32xf32>
    %460 = math.tanh %459 : vector<8x32xf32>
    %461 = vector.extract_strided_slice %458 {offsets = [0, 32], sizes = [8, 32], strides = [1, 1]} : vector<8x96xf32> to vector<8x32xf32>
    %462 = arith.mulf %461, %445 : vector<8x32xf32>
    %463 = vector.extract_strided_slice %458 {offsets = [0, 0], sizes = [8, 32], strides = [1, 1]} : vector<8x96xf32> to vector<8x32xf32>
    %464 = arith.mulf %463, %460 : vector<8x32xf32>
    %465 = arith.addf %462, %464 : vector<8x32xf32>
    %466 = vector.extract_strided_slice %458 {offsets = [0, 64], sizes = [8, 32], strides = [1, 1]} : vector<8x96xf32> to vector<8x32xf32>
    %467 = math.tanh %465 : vector<8x32xf32>
    %468 = arith.mulf %466, %467 : vector<8x32xf32>
    %469 = vector.extract_strided_slice %382 {offsets = [32, 0], sizes = [8, 128], strides = [1, 1]} : vector<64x128xf32> to vector<8x128xf32>
    %470 = arith.truncf %468 : vector<8x32xf32> to vector<8x32xbf16>
    %cst_124 = arith.constant dense<0.000000e+00> : vector<8x128xf32>
    %471 = tpu.matmul %470, %384, %cst_124 {dimension_numbers = #tpu.dot_dimension_numbers<[1], [0], [0], [1], [0, 0, 1, 1], [], []>} : vector<8x32xbf16>, vector<32x128xbf16>, vector<8x128xf32> -> vector<8x128xf32>
    %472 = arith.addf %469, %471 : vector<8x128xf32>
    %473 = vector.extract_strided_slice %472 {offsets = [0, 0], sizes = [8, 96], strides = [1, 1]} : vector<8x128xf32> to vector<8x96xf32>
    %474 = arith.negf %473 : vector<8x96xf32>
    %475 = math.exp %474 : vector<8x96xf32>
    %cst_125 = arith.constant 1.000000e+00 : f32
    %476 = vector.broadcast %cst_125 : f32 to vector<8x96xf32>
    %477 = arith.addf %476, %475 : vector<8x96xf32>
    %478 = arith.divf %476, %477 : vector<8x96xf32>
    %479 = vector.extract_strided_slice %472 {offsets = [0, 96], sizes = [8, 32], strides = [1, 1]} : vector<8x128xf32> to vector<8x32xf32>
    %480 = math.tanh %479 : vector<8x32xf32>
    %481 = vector.extract_strided_slice %478 {offsets = [0, 32], sizes = [8, 32], strides = [1, 1]} : vector<8x96xf32> to vector<8x32xf32>
    %482 = arith.mulf %481, %465 : vector<8x32xf32>
    %483 = vector.extract_strided_slice %478 {offsets = [0, 0], sizes = [8, 32], strides = [1, 1]} : vector<8x96xf32> to vector<8x32xf32>
    %484 = arith.mulf %483, %480 : vector<8x32xf32>
    %485 = arith.addf %482, %484 : vector<8x32xf32>
    %486 = vector.extract_strided_slice %478 {offsets = [0, 64], sizes = [8, 32], strides = [1, 1]} : vector<8x96xf32> to vector<8x32xf32>
    %487 = math.tanh %485 : vector<8x32xf32>
    %488 = arith.mulf %486, %487 : vector<8x32xf32>
    %489 = vector.extract_strided_slice %382 {offsets = [40, 0], sizes = [8, 128], strides = [1, 1]} : vector<64x128xf32> to vector<8x128xf32>
    %490 = arith.truncf %488 : vector<8x32xf32> to vector<8x32xbf16>
    %cst_126 = arith.constant dense<0.000000e+00> : vector<8x128xf32>
    %491 = tpu.matmul %490, %384, %cst_126 {dimension_numbers = #tpu.dot_dimension_numbers<[1], [0], [0], [1], [0, 0, 1, 1], [], []>} : vector<8x32xbf16>, vector<32x128xbf16>, vector<8x128xf32> -> vector<8x128xf32>
    %492 = arith.addf %489, %491 : vector<8x128xf32>
    %493 = vector.extract_strided_slice %492 {offsets = [0, 0], sizes = [8, 96], strides = [1, 1]} : vector<8x128xf32> to vector<8x96xf32>
    %494 = arith.negf %493 : vector<8x96xf32>
    %495 = math.exp %494 : vector<8x96xf32>
    %cst_127 = arith.constant 1.000000e+00 : f32
    %496 = vector.broadcast %cst_127 : f32 to vector<8x96xf32>
    %497 = arith.addf %496, %495 : vector<8x96xf32>
    %498 = arith.divf %496, %497 : vector<8x96xf32>
    %499 = vector.extract_strided_slice %492 {offsets = [0, 96], sizes = [8, 32], strides = [1, 1]} : vector<8x128xf32> to vector<8x32xf32>
    %500 = math.tanh %499 : vector<8x32xf32>
    %501 = vector.extract_strided_slice %498 {offsets = [0, 32], sizes = [8, 32], strides = [1, 1]} : vector<8x96xf32> to vector<8x32xf32>
    %502 = arith.mulf %501, %485 : vector<8x32xf32>
    %503 = vector.extract_strided_slice %498 {offsets = [0, 0], sizes = [8, 32], strides = [1, 1]} : vector<8x96xf32> to vector<8x32xf32>
    %504 = arith.mulf %503, %500 : vector<8x32xf32>
    %505 = arith.addf %502, %504 : vector<8x32xf32>
    %506 = vector.extract_strided_slice %498 {offsets = [0, 64], sizes = [8, 32], strides = [1, 1]} : vector<8x96xf32> to vector<8x32xf32>
    %507 = math.tanh %505 : vector<8x32xf32>
    %508 = arith.mulf %506, %507 : vector<8x32xf32>
    %509 = vector.extract_strided_slice %382 {offsets = [48, 0], sizes = [8, 128], strides = [1, 1]} : vector<64x128xf32> to vector<8x128xf32>
    %510 = arith.truncf %508 : vector<8x32xf32> to vector<8x32xbf16>
    %cst_128 = arith.constant dense<0.000000e+00> : vector<8x128xf32>
    %511 = tpu.matmul %510, %384, %cst_128 {dimension_numbers = #tpu.dot_dimension_numbers<[1], [0], [0], [1], [0, 0, 1, 1], [], []>} : vector<8x32xbf16>, vector<32x128xbf16>, vector<8x128xf32> -> vector<8x128xf32>
    %512 = arith.addf %509, %511 : vector<8x128xf32>
    %513 = vector.extract_strided_slice %512 {offsets = [0, 0], sizes = [8, 96], strides = [1, 1]} : vector<8x128xf32> to vector<8x96xf32>
    %514 = arith.negf %513 : vector<8x96xf32>
    %515 = math.exp %514 : vector<8x96xf32>
    %cst_129 = arith.constant 1.000000e+00 : f32
    %516 = vector.broadcast %cst_129 : f32 to vector<8x96xf32>
    %517 = arith.addf %516, %515 : vector<8x96xf32>
    %518 = arith.divf %516, %517 : vector<8x96xf32>
    %519 = vector.extract_strided_slice %512 {offsets = [0, 96], sizes = [8, 32], strides = [1, 1]} : vector<8x128xf32> to vector<8x32xf32>
    %520 = math.tanh %519 : vector<8x32xf32>
    %521 = vector.extract_strided_slice %518 {offsets = [0, 32], sizes = [8, 32], strides = [1, 1]} : vector<8x96xf32> to vector<8x32xf32>
    %522 = arith.mulf %521, %505 : vector<8x32xf32>
    %523 = vector.extract_strided_slice %518 {offsets = [0, 0], sizes = [8, 32], strides = [1, 1]} : vector<8x96xf32> to vector<8x32xf32>
    %524 = arith.mulf %523, %520 : vector<8x32xf32>
    %525 = arith.addf %522, %524 : vector<8x32xf32>
    %526 = vector.extract_strided_slice %518 {offsets = [0, 64], sizes = [8, 32], strides = [1, 1]} : vector<8x96xf32> to vector<8x32xf32>
    %527 = math.tanh %525 : vector<8x32xf32>
    %528 = arith.mulf %526, %527 : vector<8x32xf32>
    %529 = vector.extract_strided_slice %382 {offsets = [56, 0], sizes = [8, 128], strides = [1, 1]} : vector<64x128xf32> to vector<8x128xf32>
    %530 = arith.truncf %528 : vector<8x32xf32> to vector<8x32xbf16>
    %cst_130 = arith.constant dense<0.000000e+00> : vector<8x128xf32>
    %531 = tpu.matmul %530, %384, %cst_130 {dimension_numbers = #tpu.dot_dimension_numbers<[1], [0], [0], [1], [0, 0, 1, 1], [], []>} : vector<8x32xbf16>, vector<32x128xbf16>, vector<8x128xf32> -> vector<8x128xf32>
    %532 = arith.addf %529, %531 : vector<8x128xf32>
    %533 = vector.extract_strided_slice %532 {offsets = [0, 0], sizes = [8, 96], strides = [1, 1]} : vector<8x128xf32> to vector<8x96xf32>
    %534 = arith.negf %533 : vector<8x96xf32>
    %535 = math.exp %534 : vector<8x96xf32>
    %cst_131 = arith.constant 1.000000e+00 : f32
    %536 = vector.broadcast %cst_131 : f32 to vector<8x96xf32>
    %537 = arith.addf %536, %535 : vector<8x96xf32>
    %538 = arith.divf %536, %537 : vector<8x96xf32>
    %539 = vector.extract_strided_slice %532 {offsets = [0, 96], sizes = [8, 32], strides = [1, 1]} : vector<8x128xf32> to vector<8x32xf32>
    %540 = math.tanh %539 : vector<8x32xf32>
    %541 = vector.extract_strided_slice %538 {offsets = [0, 32], sizes = [8, 32], strides = [1, 1]} : vector<8x96xf32> to vector<8x32xf32>
    %542 = arith.mulf %541, %525 : vector<8x32xf32>
    %543 = vector.extract_strided_slice %538 {offsets = [0, 0], sizes = [8, 32], strides = [1, 1]} : vector<8x96xf32> to vector<8x32xf32>
    %544 = arith.mulf %543, %540 : vector<8x32xf32>
    %545 = arith.addf %542, %544 : vector<8x32xf32>
    %546 = vector.extract_strided_slice %538 {offsets = [0, 64], sizes = [8, 32], strides = [1, 1]} : vector<8x96xf32> to vector<8x32xf32>
    %547 = math.tanh %545 : vector<8x32xf32>
    %548 = arith.mulf %546, %547 : vector<8x32xf32>
    %c2_132 = arith.constant 2 : index
    %c0_133 = arith.constant 0 : index
    %c0_134 = arith.constant 0 : index
    %549 = vector.load %arg12[%c2_132, %c0_133, %c0_134] : memref<3x8x32xf32, #tpu.memory_space<vmem>>, vector<1x8x32xf32>
    %550 = vector.shape_cast %549 : vector<1x8x32xf32> to vector<8x32xf32>
    %551 = vector.shape_cast %548 : vector<8x32xf32> to vector<1x8x32xf32>
    tpu.vector_store %arg12[%c2_132, %c0_133, %c0_134], %551 {strides = array<i32>} : memref<3x8x32xf32, #tpu.memory_space<vmem>>, vector<1x8x32xf32>,
    %c2_135 = arith.constant 2 : index
    %c0_136 = arith.constant 0 : index
    %c0_137 = arith.constant 0 : index
    %552 = vector.load %arg13[%c2_135, %c0_136, %c0_137] : memref<3x8x32xf32, #tpu.memory_space<vmem>>, vector<1x8x32xf32>
    %553 = vector.shape_cast %552 : vector<1x8x32xf32> to vector<8x32xf32>
    %554 = vector.shape_cast %545 : vector<8x32xf32> to vector<1x8x32xf32>
    tpu.vector_store %arg13[%c2_135, %c0_136, %c0_137], %554 {strides = array<i32>} : memref<3x8x32xf32, #tpu.memory_space<vmem>>, vector<1x8x32xf32>,
    %555 = arith.truncf %548 : vector<8x32xf32> to vector<8x32xbf16>
    %c0_138 = arith.constant 0 : index
    %c0_139 = arith.constant 0 : index
    %556 = vector.load %arg9[%c0_138, %c0_139] : memref<32x128xbf16, #tpu.memory_space<vmem>>, vector<32x128xbf16>
    %cst_140 = arith.constant dense<0.000000e+00> : vector<8x128xf32>
    %557 = tpu.matmul %555, %556, %cst_140 {dimension_numbers = #tpu.dot_dimension_numbers<[1], [0], [0], [1], [0, 0, 1, 1], [], []>} : vector<8x32xbf16>, vector<32x128xbf16>, vector<8x128xf32> -> vector<8x128xf32>
    %c0_141 = arith.constant 0 : index
    %c0_142 = arith.constant 0 : index
    %558 = vector.load %arg10[%c0_141, %c0_142] : memref<1x128xf32, #tpu.memory_space<vmem>>, vector<1x128xf32>
    %559 = vector.broadcast %558 : vector<1x128xf32> to vector<8x128xf32>
    %560 = arith.addf %557, %559 : vector<8x128xf32>
    %c0_143 = arith.constant 0 : index
    %c0_144 = arith.constant 0 : index
    %561 = vector.load %arg11[%c0_143, %c0_144] : memref<8x128xf32, #tpu.memory_space<vmem>>, vector<8x128xf32>
    tpu.vector_store %arg11[%c0_143, %c0_144], %560 {strides = array<i32>} : memref<8x128xf32, #tpu.memory_space<vmem>>, vector<8x128xf32>,
    return
  }
}

</mosaic_0001>

<llo_original>
// kernel: tpu_custom_call.1
$region0: #{tpu_custom_call.1}
  #allocation0 [shape = 'u32[]', space=smem, size = 0x4, offset = 0x4, fixed_abs, tag = 'smem constant byte address 0x4 - core index']
  #allocation1 [shape = 'u32[72,128]{1,0:T(1,128)}', space=vmem, size = 0x9000, scoped, tag = 'internal scratch']
  #allocation2 [shape = 'f32[64,32]{1,0:T(8,128)}', space=vmem, size = 0x8000, scoped, tag = 'scratch operand']
  %s0 = inlined_call_operand.vmem [shape: bf16[64,32], index: 0, kind: input, shape index: {}]
  %s1 = inlined_call_operand.vmem [shape: bf16[32,128], index: 1, kind: input, shape index: {}]
  %s2 = inlined_call_operand.hbm [shape: bf16[32,128], index: 2, kind: input, shape index: {}]
  %s3 = inlined_call_operand.vmem [shape: f32[1,128], index: 3, kind: input, shape index: {}]
  %s4 = inlined_call_operand.vmem [shape: bf16[2,32,128], index: 4, kind: input, shape index: {}]
  %s5 = inlined_call_operand.hbm [shape: bf16[2,32,128], index: 5, kind: input, shape index: {}]
  %s6 = inlined_call_operand.vmem [shape: f32[2,1,128], index: 6, kind: input, shape index: {}]
  %s7 = inlined_call_operand.hbm [shape: f32[3,8,32], index: 7, kind: input, shape index: {}]
  %s8 = inlined_call_operand.hbm [shape: f32[3,8,32], index: 8, kind: input, shape index: {}]
  %s9 = inlined_call_operand.hbm [shape: bf16[32,128], index: 9, kind: input, shape index: {}]
  %s10 = inlined_call_operand.vmem [shape: f32[1,128], index: 10, kind: input, shape index: {}]
  %s11 = inlined_call_operand.hbm [shape: f32[8,128], index: 11, kind: output, shape index: {0}]
  %s12 = inlined_call_operand.hbm [shape: f32[3,8,32], index: 12, kind: output, shape index: {1}]
  %s13 = inlined_call_operand.hbm [shape: f32[3,8,32], index: 13, kind: output, shape index: {2}]
  %14 = xla_tuple %s11, %s12, %s13
  %s15 = sld [smem:[#allocation0]]
  $region90: #{tpu_custom_call.1} parent=0
    _
  %s17 = ssub.s32 1, %s15
  %s18 = scalar_select 0, %s17, %s15
  $region1: #{tpu_custom_call.1} parent=0
    #allocation3 [shape = 'u8[8192]{0}', space=vmem, size = 0x2000, scoped, tag = 'input window, operand 2, single buffered']
    #allocation4 [shape = 's32[1]{0}', space=sflag, size = 0x4, scoped, tag = 'scoped memory for tpu_custom_call.1']
    #allocation5 [shape = 's32[1]{0}', space=sflag, size = 0x4, scoped, tag = 'scoped memory for tpu_custom_call.1']
    #allocation6 [shape = 'u8[16384]{0}', space=vmem, size = 0x4000, scoped, tag = 'input window, operand 5, single buffered']
    #allocation7 [shape = 's32[1]{0}', space=sflag, size = 0x4, scoped, tag = 'scoped memory for tpu_custom_call.1']
    #allocation8 [shape = 'u8[12288]{0}', space=vmem, size = 0x3000, scoped, tag = 'input window, operand 7, single buffered']
    #allocation9 [shape = 'u8[12288]{0}', space=vmem, size = 0x3000, scoped, tag = 'input window, operand 8, single buffered']
    #allocation10 [shape = 's32[1]{0}', space=sflag, size = 0x4, scoped, tag = 'scoped memory for tpu_custom_call.1']
    #allocation11 [shape = 'u8[8192]{0}', space=vmem, size = 0x2000, scoped, tag = 'input window, operand 9, single buffered']
    #allocation12 [shape = 'u8[4096]{0}', space=vmem, size = 0x1000, scoped, tag = 'output window, operand 0, single buffered']
    #allocation13 [shape = 'u8[12288]{0}', space=vmem, size = 0x3000, scoped, tag = 'output window, operand 1, single buffered']
    #allocation14 [shape = 's32[1]{0}', space=sflag, size = 0x4, scoped, tag = 'scoped memory for tpu_custom_call.1']
    #allocation15 [shape = 'u8[12288]{0}', space=vmem, size = 0x3000, scoped, tag = 'output window, operand 2, single buffered']
    %19 = vsyncpa [#allocation4], 0
    %20 = vsyncpa [#allocation7], 0
    %21 = vsyncpa [#allocation10], 0
    %22 = vsyncpa [#allocation5], 0
    %23 = vsyncpa [#allocation14], 0
    // Predicated region
    $region2: #{tpu_custom_call.1} parent=1 // pred_check
      _
    $region3: #{tpu_custom_call.1} parent=1 // pred_check_branch
      %25 = sbr.rel (0) target = $region5
    $region4: #{tpu_custom_call.1} parent=1 // pred_region
      _
    $region5: #{tpu_custom_call.1} parent=1 // pred_fallthru
      _
    // Predicated region
    $region6: #{tpu_custom_call.1} parent=1 // pred_check
      _
    $region7: #{tpu_custom_call.1} parent=1 // pred_check_branch
      %27 = sbr.rel (0) target = $region9
    $region8: #{tpu_custom_call.1} parent=1 // pred_region
      _
    $region9: #{tpu_custom_call.1} parent=1 // pred_fallthru
      _
    // Predicated region
    $region10: #{tpu_custom_call.1} parent=1 // pred_check
      _
    $region11: #{tpu_custom_call.1} parent=1 // pred_check_branch
      %29 = sbr.rel (0) target = $region13
    $region12: #{tpu_custom_call.1} parent=1 // pred_region
      %31 = vsyncadd [#allocation4], 0
      %s32 = sshll.u32 %s2, 4
      %s33 = int_to_ptr.hbm [resolvable:$true] %s32
      %s34 = sshll.u32 [#allocation3], 4
      %s35 = int_to_ptr.vmem [resolvable:$true] %s34
      %40 = dma.hbm_to_vmem [thread:$0]  %s33, 256, %s35, [#allocation4], 64, 64, 4
    $region13: #{tpu_custom_call.1} parent=1 // pred_fallthru
      _
    // Predicated region
    $region14: #{tpu_custom_call.1} parent=1 // pred_check
      _
    $region15: #{tpu_custom_call.1} parent=1 // pred_check_branch
      %42 = sbr.rel (0) target = $region17
    $region16: #{tpu_custom_call.1} parent=1 // pred_region
      _
    $region17: #{tpu_custom_call.1} parent=1 // pred_fallthru
      _
    // Predicated region
    $region18: #{tpu_custom_call.1} parent=1 // pred_check
      _
    $region19: #{tpu_custom_call.1} parent=1 // pred_check_branch
      %44 = sbr.rel (0) target = $region21
    $region20: #{tpu_custom_call.1} parent=1 // pred_region
      _
    $region21: #{tpu_custom_call.1} parent=1 // pred_fallthru
      _
    // Predicated region
    $region22: #{tpu_custom_call.1} parent=1 // pred_check
      _
    $region23: #{tpu_custom_call.1} parent=1 // pred_check_branch
      %46 = sbr.rel (0) target = $region25
    $region24: #{tpu_custom_call.1} parent=1 // pred_region
      %48 = vsyncadd [#allocation7], 0
      %s49 = sshll.u32 %s5, 4
      %s50 = int_to_ptr.hbm [resolvable:$true] %s49
      %s51 = sshll.u32 [#allocation6], 4
      %s52 = int_to_ptr.vmem [resolvable:$true] %s51
      %57 = dma.hbm_to_vmem [thread:$0]  %s50, 512, %s52, [#allocation7], 64, 64, 4
    $region25: #{tpu_custom_call.1} parent=1 // pred_fallthru
      _
    // Predicated region
    $region26: #{tpu_custom_call.1} parent=1 // pred_check
      _
    $region27: #{tpu_custom_call.1} parent=1 // pred_check_branch
      %59 = sbr.rel (0) target = $region29
    $region28: #{tpu_custom_call.1} parent=1 // pred_region
      _
    $region29: #{tpu_custom_call.1} parent=1 // pred_fallthru
      _
    // Predicated region
    $region30: #{tpu_custom_call.1} parent=1 // pred_check
      _
    $region31: #{tpu_custom_call.1} parent=1 // pred_check_branch
      %61 = sbr.rel (0) target = $region33
    $region32: #{tpu_custom_call.1} parent=1 // pred_region
      %63 = vsyncadd [#allocation7], 0
      %s64 = sshll.u32 %s7, 4
      %s65 = int_to_ptr.hbm [resolvable:$true] %s64
      %s66 = sshll.u32 [#allocation8], 4
      %s67 = int_to_ptr.vmem [resolvable:$true] %s66
      %72 = dma.hbm_to_vmem [thread:$0]  %s65, 384, %s67, [#allocation7], 128, 128, 8
    $region33: #{tpu_custom_call.1} parent=1 // pred_fallthru
      _
    // Predicated region
    $region34: #{tpu_custom_call.1} parent=1 // pred_check
      _
    $region35: #{tpu_custom_call.1} parent=1 // pred_check_branch
      %74 = sbr.rel (0) target = $region37
    $region36: #{tpu_custom_call.1} parent=1 // pred_region
      %76 = vsyncadd [#allocation10], 0
      %s77 = sshll.u32 %s8, 4
      %s78 = int_to_ptr.hbm [resolvable:$true] %s77
      %s79 = sshll.u32 [#allocation9], 4
      %s80 = int_to_ptr.vmem [resolvable:$true] %s79
      %85 = dma.hbm_to_vmem [thread:$0]  %s78, 384, %s80, [#allocation10], 128, 128, 8
    $region37: #{tpu_custom_call.1} parent=1 // pred_fallthru
      _
    // Predicated region
    $region38: #{tpu_custom_call.1} parent=1 // pred_check
      _
    $region39: #{tpu_custom_call.1} parent=1 // pred_check_branch
      %87 = sbr.rel (0) target = $region41
    $region40: #{tpu_custom_call.1} parent=1 // pred_region
      %89 = vsyncadd [#allocation10], 0
      %s90 = sshll.u32 %s9, 4
      %s91 = int_to_ptr.hbm [resolvable:$true] %s90
      %s92 = sshll.u32 [#allocation11], 4
      %s93 = int_to_ptr.vmem [resolvable:$true] %s92
      %98 = dma.hbm_to_vmem [thread:$0]  %s91, 256, %s93, [#allocation10], 64, 64, 4
    $region41: #{tpu_custom_call.1} parent=1 // pred_fallthru
      _
    // Predicated region
    $region42: #{tpu_custom_call.1} parent=1 // pred_check
      _
    $region43: #{tpu_custom_call.1} parent=1 // pred_check_branch
      %100 = sbr.rel (0) target = $region45
    $region44: #{tpu_custom_call.1} parent=1 // pred_region
      _
    $region45: #{tpu_custom_call.1} parent=1 // pred_fallthru
      _
    // Predicated region
    $region46: #{tpu_custom_call.1} parent=1 // pred_check
      _
    $region47: #{tpu_custom_call.1} parent=1 // pred_check_branch
      %102 = sbr.rel (0) target = $region49
    $region48: #{tpu_custom_call.1} parent=1 // pred_region
      %104 = dma.done [#allocation4], 256
    $region49: #{tpu_custom_call.1} parent=1 // pred_fallthru
      _
    // Predicated region
    $region50: #{tpu_custom_call.1} parent=1 // pred_check
      _
    $region51: #{tpu_custom_call.1} parent=1 // pred_check_branch
      %106 = sbr.rel (0) target = $region53
    $region52: #{tpu_custom_call.1} parent=1 // pred_region
      %108 = dma.done [#allocation7], 512
    $region53: #{tpu_custom_call.1} parent=1 // pred_fallthru
      _
    // Predicated region
    $region54: #{tpu_custom_call.1} parent=1 // pred_check
      _
    $region55: #{tpu_custom_call.1} parent=1 // pred_check_branch
      %110 = sbr.rel (0) target = $region57
    $region56: #{tpu_custom_call.1} parent=1 // pred_region
      %112 = dma.done [#allocation7], 384
    $region57: #{tpu_custom_call.1} parent=1 // pred_fallthru
      _
    // Predicated region
    $region58: #{tpu_custom_call.1} parent=1 // pred_check
      _
    $region59: #{tpu_custom_call.1} parent=1 // pred_check_branch
      %114 = sbr.rel (0) target = $region61
    $region60: #{tpu_custom_call.1} parent=1 // pred_region
      %116 = dma.done [#allocation10], 384
    $region61: #{tpu_custom_call.1} parent=1 // pred_fallthru
      _
    // Predicated region
    $region62: #{tpu_custom_call.1} parent=1 // pred_check
      _
    $region63: #{tpu_custom_call.1} parent=1 // pred_check_branch
      %118 = sbr.rel (0) target = $region65
    $region64: #{tpu_custom_call.1} parent=1 // pred_region
      %120 = dma.done [#allocation10], 256
    $region65: #{tpu_custom_call.1} parent=1 // pred_fallthru
      _
    %v122 = vld [vmem:[%s0] sm:$0xf]
    %v123 = vld [vmem:[%s0 + $0x4] sm:$0xf]
    %v124 = vld [vmem:[%s0 + $0x8] sm:$0xf]
    %v125 = vld [vmem:[%s0 + $0xc] sm:$0xf]
    %v126 = vld [vmem:[%s0 + $0x10] sm:$0xf]
    %v127 = vld [vmem:[%s0 + $0x14] sm:$0xf]
    %v128 = vld [vmem:[%s0 + $0x18] sm:$0xf]
    %v129 = vld [vmem:[%s0 + $0x1c] sm:$0xf]
    %v130 = vld [vmem:[%s1] sm:$0xf]
    %v131 = vld [vmem:[%s1 + $0x4] sm:$0xf]
    %v132 = vld [vmem:[%s1 + $0x8] sm:$0xf]
    %v133 = vld [vmem:[%s1 + $0xc] sm:$0xf]
    %v134 = vld [vmem:[%s3] sm:$0x1]
    %v136 = vperm.slane %v134, 0
    %v146 = vunpack.c.l.b16 %v122
    %v147 = vunpack.c.l.b16 %v123
    %v148 = vunpack.c.l.b16 %v124
    %v149 = vunpack.c.l.b16 %v125
    %v150 = vunpack.c.l.b16 %v126
    %v151 = vunpack.c.l.b16 %v127
    %v152 = vunpack.c.l.b16 %v128
    %v153 = vunpack.c.l.b16 %v129
    %v154 = vpack.c.b16 %v147, %v146
    %v155 = vpack.c.b16 %v149, %v148
    %v156 = vpack.c.b16 %v151, %v150
    %v157 = vpack.c.b16 %v153, %v152
    %v162 = vunpack.c.l.b16 %v130
    %v163 = vunpack.c.l.b16 %v131
    %v164 = vunpack.c.l.b16 %v132
    %v165 = vunpack.c.l.b16 %v133
    %v166 = vpack.c.b16 %v163, %v162
    %v167 = vpack.c.b16 %v165, %v164
    %vm170 = vcmask 261120
    %v172 = vsel %vm170, %v154, 0
    %v175 = vsel %vm170, %v155, 0
    %v178 = vsel %vm170, %v156, 0
    %v181 = vsel %vm170, %v157, 0
    %183 = vmatpush.bf16.msra.mxu0 0
    %184 = vmatpush.bf16.msra.mxu0 0
    %185 = vmatpush.bf16.msra.mxu0 0
    %186 = vmatpush.bf16.msra.mxu0 0
    %187 = vmatpush.bf16.msra.mxu0 0
    %188 = vmatpush.bf16.msra.mxu0 0
    %189 = vmatpush.bf16.msra.mxu0 %v167
    %190 = vmatpush.bf16.msra.mxu0 %v166
    %191 = vmatmul.bf16.gmra.mxu0 %v172
    %v192 = vpop.f32.mrf.mxu0
    %v193 = vadd.f32 %v136, %v192
    %v194 = vpop.f32.mrf.mxu0
    %v195 = vadd.f32 %v136, %v194
    %196 = vmatmul.bf16.gmra.mxu0 %v175
    %v197 = vpop.f32.mrf.mxu0
    %v198 = vadd.f32 %v136, %v197
    %v199 = vpop.f32.mrf.mxu0
    %v200 = vadd.f32 %v136, %v199
    %201 = vmatmul.bf16.gmra.mxu0 %v178
    %v202 = vpop.f32.mrf.mxu0
    %v203 = vadd.f32 %v136, %v202
    %v204 = vpop.f32.mrf.mxu0
    %v205 = vadd.f32 %v136, %v204
    %206 = vmatmul.bf16.gmra.mxu0 %v181
    %v207 = vpop.f32.mrf.mxu0
    %v208 = vadd.f32 %v136, %v207
    %v209 = vpop.f32.mrf.mxu0
    %v210 = vadd.f32 %v136, %v209
    %211 = vdwg.mxu0
    %v212 = vld [vmem:[#allocation3] sm:$0xf]
    %v213 = vld [vmem:[#allocation3 + $0x4] sm:$0xf]
    %v214 = vld [vmem:[#allocation3 + $0x8] sm:$0xf]
    %v215 = vld [vmem:[#allocation3 + $0xc] sm:$0xf]
    %v216 = vld [vmem:[#allocation8] sm:$0xff]
    %v217 = vld [vmem:[#allocation9] sm:$0xff]
    %v218 = vpack.c.bf16 %v216, %v216
    %v223 = vunpack.c.l.b16 %v212
    %v224 = vunpack.c.l.b16 %v213
    %v225 = vunpack.c.l.b16 %v214
    %v226 = vunpack.c.l.b16 %v215
    %v227 = vpack.c.b16 %v224, %v223
    %v228 = vpack.c.b16 %v226, %v225
    %v232 = vsel %vm170, %v218, 0
    %234 = vmatpush.bf16.msra.mxu0 0
    %235 = vmatpush.bf16.msra.mxu0 0
    %236 = vmatpush.bf16.msra.mxu0 0
    %237 = vmatpush.bf16.msra.mxu0 0
    %238 = vmatpush.bf16.msra.mxu0 0
    %239 = vmatpush.bf16.msra.mxu0 0
    %240 = vmatpush.bf16.msra.mxu0 %v228
    %241 = vmatpush.bf16.msra.mxu0 %v227
    %242 = vmatmul.bf16.gmra.mxu0 %v232
    %v243 = vpop.f32.mrf.mxu0
    %v244 = vadd.f32 0.0, %v243
    %v245 = vpop.f32.mrf.mxu0
    %246 = vdwg.mxu0
    %v247 = vadd.f32 %v193, %v244
    %v248 = vxor.u32 %v247, 2147483648
    %v249 = vmul.f32 %v248, 1.442695
    %v250 = vpow.pop %v249
    %v251 = vadd.f32 %v250, 1.0
    %v252 = vrcp.pop %v251
    %v253 = vmul.f32 %v251, %v252
    %v254 = vsub.f32 1.0, %v253
    %v255 = vmul.f32 %v252, %v254
    %v256 = vadd.f32 %v252, %v255
    %vm257 = vweird.f32 %v251
    %vm258 = vweird.f32 %v252
    %vm259 = vmor %vm257, %vm258
    %v260 = vsel %vm259, %v252, %v256
    %v261 = vand.u32 2147483647, %v251
    %vm262 = vcmp.eq.f32.partialorder %v261, 8.507059e+37
    %v263 = vand.u32 %v251, 2147483648
    %v264 = vor.u32 1.1754944e-38, %v263
    %v265 = vsel %vm262, %v264, %v260
    %v266 = vmul.f32 1.0, %v265
    %v267 = vtanh.pop %v247
    %269 = vrot.lane.b32.xlu0 %v217, 32
    %v270 = vpop.permute.xlu0 %269
    %v272 = vmul.f32 %v266, %v270
    %274 = vrot.lane.b32.xlu0 %v267, 32
    %v275 = vpop.permute.xlu0 %274
    %v277 = vmul.f32 %v266, %v275
    %279 = vrot.lane.b32.xlu0 %v277, 32
    %v280 = vpop.permute.xlu0 %279
    %v282 = vadd.f32 %v272, %v280
    %v283 = vtanh.pop %v282
    %285 = vrot.lane.b32.xlu0 %v283, 32
    %v286 = vpop.permute.xlu0 %285
    %v288 = vmul.f32 %v266, %v286
    %290 = vrot.lane.b32.xlu0 %v288, 64
    %v291 = vpop.permute.xlu0 %290
    %293 = vst.msk [vmem:[#allocation2] sm:$0xff] %vm170, %v291
    %v294 = vpack.c.bf16 %v288, %v288
    %296 = vrot.lane.b32.xlu0 %v294, 64
    %v297 = vpop.permute.xlu0 %296
    %v299 = vsel %vm170, %v297, 0
    %301 = vmatpush.bf16.msra.mxu0 0
    %302 = vmatpush.bf16.msra.mxu0 0
    %303 = vmatpush.bf16.msra.mxu0 0
    %304 = vmatpush.bf16.msra.mxu0 0
    %305 = vmatpush.bf16.msra.mxu0 0
    %306 = vmatpush.bf16.msra.mxu0 0
    %307 = vmatpush.bf16.msra.mxu0 %v228
    %308 = vmatpush.bf16.msra.mxu0 %v227
    %309 = vmatmul.bf16.gmra.mxu0 %v299
    %v310 = vpop.f32.mrf.mxu0
    %v311 = vadd.f32 0.0, %v310
    %v312 = vpop.f32.mrf.mxu0
    %313 = vdwg.mxu0
    %v314 = vadd.f32 %v195, %v311
    %v315 = vxor.u32 %v314, 2147483648
    %v316 = vmul.f32 %v315, 1.442695
    %v317 = vpow.pop %v316
    %v318 = vadd.f32 %v317, 1.0
    %v319 = vrcp.pop %v318
    %v320 = vmul.f32 %v318, %v319
    %v321 = vsub.f32 1.0, %v320
    %v322 = vmul.f32 %v319, %v321
    %v323 = vadd.f32 %v319, %v322
    %vm324 = vweird.f32 %v318
    %vm325 = vweird.f32 %v319
    %vm326 = vmor %vm324, %vm325
    %v327 = vsel %vm326, %v319, %v323
    %v328 = vand.u32 2147483647, %v318
    %vm329 = vcmp.eq.f32.partialorder %v328, 8.507059e+37
    %v330 = vand.u32 %v318, 2147483648
    %v331 = vor.u32 1.1754944e-38, %v330
    %v332 = vsel %vm329, %v331, %v327
    %v333 = vmul.f32 1.0, %v332
    %v334 = vtanh.pop %v314
    %v335 = vmul.f32 %v333, %v282
    %337 = vrot.lane.b32.xlu0 %v334, 32
    %v338 = vpop.permute.xlu0 %337
    %v340 = vmul.f32 %v333, %v338
    %342 = vrot.lane.b32.xlu0 %v340, 32
    %v343 = vpop.permute.xlu0 %342
    %v345 = vadd.f32 %v335, %v343
    %v346 = vtanh.pop %v345
    %348 = vrot.lane.b32.xlu0 %v346, 32
    %v349 = vpop.permute.xlu0 %348
    %v351 = vmul.f32 %v333, %v349
    %353 = vrot.lane.b32.xlu0 %v351, 64
    %v354 = vpop.permute.xlu0 %353
    %356 = vst.msk [vmem:[#allocation2 + $0x8] sm:$0xff] %vm170, %v354
    %v357 = vpack.c.bf16 %v351, %v351
    %359 = vrot.lane.b32.xlu0 %v357, 64
    %v360 = vpop.permute.xlu0 %359
    %v362 = vsel %vm170, %v360, 0
    %364 = vmatpush.bf16.msra.mxu0 0
    %365 = vmatpush.bf16.msra.mxu0 0
    %366 = vmatpush.bf16.msra.mxu0 0
    %367 = vmatpush.bf16.msra.mxu0 0
    %368 = vmatpush.bf16.msra.mxu0 0
    %369 = vmatpush.bf16.msra.mxu0 0
    %370 = vmatpush.bf16.msra.mxu0 %v228
    %371 = vmatpush.bf16.msra.mxu0 %v227
    %372 = vmatmul.bf16.gmra.mxu0 %v362
    %v373 = vpop.f32.mrf.mxu0
    %v374 = vadd.f32 0.0, %v373
    %v375 = vpop.f32.mrf.mxu0
    %376 = vdwg.mxu0
    %v377 = vadd.f32 %v198, %v374
    %v378 = vxor.u32 %v377, 2147483648
    %v379 = vmul.f32 %v378, 1.442695
    %v380 = vpow.pop %v379
    %v381 = vadd.f32 %v380, 1.0
    %v382 = vrcp.pop %v381
    %v383 = vmul.f32 %v381, %v382
    %v384 = vsub.f32 1.0, %v383
    %v385 = vmul.f32 %v382, %v384
    %v386 = vadd.f32 %v382, %v385
    %vm387 = vweird.f32 %v381
    %vm388 = vweird.f32 %v382
    %vm389 = vmor %vm387, %vm388
    %v390 = vsel %vm389, %v382, %v386
    %v391 = vand.u32 2147483647, %v381
    %vm392 = vcmp.eq.f32.partialorder %v391, 8.507059e+37
    %v393 = vand.u32 %v381, 2147483648
    %v394 = vor.u32 1.1754944e-38, %v393
    %v395 = vsel %vm392, %v394, %v390
    %v396 = vmul.f32 1.0, %v395
    %v397 = vtanh.pop %v377
    %v398 = vmul.f32 %v396, %v345
    %400 = vrot.lane.b32.xlu0 %v397, 32
    %v401 = vpop.permute.xlu0 %400
    %v403 = vmul.f32 %v396, %v401
    %405 = vrot.lane.b32.xlu0 %v403, 32
    %v406 = vpop.permute.xlu0 %405
    %v408 = vadd.f32 %v398, %v406
    %v409 = vtanh.pop %v408
    %411 = vrot.lane.b32.xlu0 %v409, 32
    %v412 = vpop.permute.xlu0 %411
    %v414 = vmul.f32 %v396, %v412
    %416 = vrot.lane.b32.xlu0 %v414, 64
    %v417 = vpop.permute.xlu0 %416
    %419 = vst.msk [vmem:[#allocation2 + $0x10] sm:$0xff] %vm170, %v417
    %v420 = vpack.c.bf16 %v414, %v414
    %422 = vrot.lane.b32.xlu0 %v420, 64
    %v423 = vpop.permute.xlu0 %422
    %v425 = vsel %vm170, %v423, 0
    %427 = vmatpush.bf16.msra.mxu0 0
    %428 = vmatpush.bf16.msra.mxu0 0
    %429 = vmatpush.bf16.msra.mxu0 0
    %430 = vmatpush.bf16.msra.mxu0 0
    %431 = vmatpush.bf16.msra.mxu0 0
    %432 = vmatpush.bf16.msra.mxu0 0
    %433 = vmatpush.bf16.msra.mxu0 %v228
    %434 = vmatpush.bf16.msra.mxu0 %v227
    %435 = vmatmul.bf16.gmra.mxu0 %v425
    %v436 = vpop.f32.mrf.mxu0
    %v437 = vadd.f32 0.0, %v436
    %v438 = vpop.f32.mrf.mxu0
    %439 = vdwg.mxu0
    %v440 = vadd.f32 %v200, %v437
    %v441 = vxor.u32 %v440, 2147483648
    %v442 = vmul.f32 %v441, 1.442695
    %v443 = vpow.pop %v442
    %v444 = vadd.f32 %v443, 1.0
    %v445 = vrcp.pop %v444
    %v446 = vmul.f32 %v444, %v445
    %v447 = vsub.f32 1.0, %v446
    %v448 = vmul.f32 %v445, %v447
    %v449 = vadd.f32 %v445, %v448
    %vm450 = vweird.f32 %v444
    %vm451 = vweird.f32 %v445
    %vm452 = vmor %vm450, %vm451
    %v453 = vsel %vm452, %v445, %v449
    %v454 = vand.u32 2147483647, %v444
    %vm455 = vcmp.eq.f32.partialorder %v454, 8.507059e+37
    %v456 = vand.u32 %v444, 2147483648
    %v457 = vor.u32 1.1754944e-38, %v456
    %v458 = vsel %vm455, %v457, %v453
    %v459 = vmul.f32 1.0, %v458
    %v460 = vtanh.pop %v440
    %v461 = vmul.f32 %v459, %v408
    %463 = vrot.lane.b32.xlu0 %v460, 32
    %v464 = vpop.permute.xlu0 %463
    %v466 = vmul.f32 %v459, %v464
    %468 = vrot.lane.b32.xlu0 %v466, 32
    %v469 = vpop.permute.xlu0 %468
    %v471 = vadd.f32 %v461, %v469
    %v472 = vtanh.pop %v471
    %474 = vrot.lane.b32.xlu0 %v472, 32
    %v475 = vpop.permute.xlu0 %474
    %v477 = vmul.f32 %v459, %v475
    %479 = vrot.lane.b32.xlu0 %v477, 64
    %v480 = vpop.permute.xlu0 %479
    %482 = vst.msk [vmem:[#allocation2 + $0x18] sm:$0xff] %vm170, %v480
    %v483 = vpack.c.bf16 %v477, %v477
    %485 = vrot.lane.b32.xlu0 %v483, 64
    %v486 = vpop.permute.xlu0 %485
    %v488 = vsel %vm170, %v486, 0
    %490 = vmatpush.bf16.msra.mxu0 0
    %491 = vmatpush.bf16.msra.mxu0 0
    %492 = vmatpush.bf16.msra.mxu0 0
    %493 = vmatpush.bf16.msra.mxu0 0
    %494 = vmatpush.bf16.msra.mxu0 0
    %495 = vmatpush.bf16.msra.mxu0 0
    %496 = vmatpush.bf16.msra.mxu0 %v228
    %497 = vmatpush.bf16.msra.mxu0 %v227
    %498 = vmatmul.bf16.gmra.mxu0 %v488
    %v499 = vpop.f32.mrf.mxu0
    %v500 = vadd.f32 0.0, %v499
    %v501 = vpop.f32.mrf.mxu0
    %502 = vdwg.mxu0
    %v503 = vadd.f32 %v203, %v500
    %v504 = vxor.u32 %v503, 2147483648
    %v505 = vmul.f32 %v504, 1.442695
    %v506 = vpow.pop %v505
    %v507 = vadd.f32 %v506, 1.0
    %v508 = vrcp.pop %v507
    %v509 = vmul.f32 %v507, %v508
    %v510 = vsub.f32 1.0, %v509
    %v511 = vmul.f32 %v508, %v510
    %v512 = vadd.f32 %v508, %v511
    %vm513 = vweird.f32 %v507
    %vm514 = vweird.f32 %v508
    %vm515 = vmor %vm513, %vm514
    %v516 = vsel %vm515, %v508, %v512
    %v517 = vand.u32 2147483647, %v507
    %vm518 = vcmp.eq.f32.partialorder %v517, 8.507059e+37
    %v519 = vand.u32 %v507, 2147483648
    %v520 = vor.u32 1.1754944e-38, %v519
    %v521 = vsel %vm518, %v520, %v516
    %v522 = vmul.f32 1.0, %v521
    %v523 = vtanh.pop %v503
    %v524 = vmul.f32 %v522, %v471
    %526 = vrot.lane.b32.xlu0 %v523, 32
    %v527 = vpop.permute.xlu0 %526
    %v529 = vmul.f32 %v522, %v527
    %531 = vrot.lane.b32.xlu0 %v529, 32
    %v532 = vpop.permute.xlu0 %531
    %v534 = vadd.f32 %v524, %v532
    %v535 = vtanh.pop %v534
    %537 = vrot.lane.b32.xlu0 %v535, 32
    %v538 = vpop.permute.xlu0 %537
    %v540 = vmul.f32 %v522, %v538
    %542 = vrot.lane.b32.xlu0 %v540, 64
    %v543 = vpop.permute.xlu0 %542
    %545 = vst.msk [vmem:[#allocation2 + $0x20] sm:$0xff] %vm170, %v543
    %v546 = vpack.c.bf16 %v540, %v540
    %548 = vrot.lane.b32.xlu0 %v546, 64
    %v549 = vpop.permute.xlu0 %548
    %v551 = vsel %vm170, %v549, 0
    %553 = vmatpush.bf16.msra.mxu0 0
    %554 = vmatpush.bf16.msra.mxu0 0
    %555 = vmatpush.bf16.msra.mxu0 0
    %556 = vmatpush.bf16.msra.mxu0 0
    %557 = vmatpush.bf16.msra.mxu0 0
    %558 = vmatpush.bf16.msra.mxu0 0
    %559 = vmatpush.bf16.msra.mxu0 %v228
    %560 = vmatpush.bf16.msra.mxu0 %v227
    %561 = vmatmul.bf16.gmra.mxu0 %v551
    %v562 = vpop.f32.mrf.mxu0
    %v563 = vadd.f32 0.0, %v562
    %v564 = vpop.f32.mrf.mxu0
    %565 = vdwg.mxu0
    %v566 = vadd.f32 %v205, %v563
    %v567 = vxor.u32 %v566, 2147483648
    %v568 = vmul.f32 %v567, 1.442695
    %v569 = vpow.pop %v568
    %v570 = vadd.f32 %v569, 1.0
    %v571 = vrcp.pop %v570
    %v572 = vmul.f32 %v570, %v571
    %v573 = vsub.f32 1.0, %v572
    %v574 = vmul.f32 %v571, %v573
    %v575 = vadd.f32 %v571, %v574
    %vm576 = vweird.f32 %v570
    %vm577 = vweird.f32 %v571
    %vm578 = vmor %vm576, %vm577
    %v579 = vsel %vm578, %v571, %v575
    %v580 = vand.u32 2147483647, %v570
    %vm581 = vcmp.eq.f32.partialorder %v580, 8.507059e+37
    %v582 = vand.u32 %v570, 2147483648
    %v583 = vor.u32 1.1754944e-38, %v582
    %v584 = vsel %vm581, %v583, %v579
    %v585 = vmul.f32 1.0, %v584
    %v586 = vtanh.pop %v566
    %v587 = vmul.f32 %v585, %v534
    %589 = vrot.lane.b32.xlu0 %v586, 32
    %v590 = vpop.permute.xlu0 %589
    %v592 = vmul.f32 %v585, %v590
    %594 = vrot.lane.b32.xlu0 %v592, 32
    %v595 = vpop.permute.xlu0 %594
    %v597 = vadd.f32 %v587, %v595
    %v598 = vtanh.pop %v597
    %600 = vrot.lane.b32.xlu0 %v598, 32
    %v601 = vpop.permute.xlu0 %600
    %v603 = vmul.f32 %v585, %v601
    %605 = vrot.lane.b32.xlu0 %v603, 64
    %v606 = vpop.permute.xlu0 %605
    %608 = vst.msk [vmem:[#allocation2 + $0x28] sm:$0xff] %vm170, %v606
    %v609 = vpack.c.bf16 %v603, %v603
    %611 = vrot.lane.b32.xlu0 %v609, 64
    %v612 = vpop.permute.xlu0 %611
    %v614 = vsel %vm170, %v612, 0
    %616 = vmatpush.bf16.msra.mxu0 0
    %617 = vmatpush.bf16.msra.mxu0 0
    %618 = vmatpush.bf16.msra.mxu0 0
    %619 = vmatpush.bf16.msra.mxu0 0
    %620 = vmatpush.bf16.msra.mxu0 0
    %621 = vmatpush.bf16.msra.mxu0 0
    %622 = vmatpush.bf16.msra.mxu0 %v228
    %623 = vmatpush.bf16.msra.mxu0 %v227
    %624 = vmatmul.bf16.gmra.mxu0 %v614
    %v625 = vpop.f32.mrf.mxu0
    %v626 = vadd.f32 0.0, %v625
    %v627 = vpop.f32.mrf.mxu0
    %628 = vdwg.mxu0
    %v629 = vadd.f32 %v208, %v626
    %v630 = vxor.u32 %v629, 2147483648
    %v631 = vmul.f32 %v630, 1.442695
    %v632 = vpow.pop %v631
    %v633 = vadd.f32 %v632, 1.0
    %v634 = vrcp.pop %v633
    %v635 = vmul.f32 %v633, %v634
    %v636 = vsub.f32 1.0, %v635
    %v637 = vmul.f32 %v634, %v636
    %v638 = vadd.f32 %v634, %v637
    %vm639 = vweird.f32 %v633
    %vm640 = vweird.f32 %v634
    %vm641 = vmor %vm639, %vm640
    %v642 = vsel %vm641, %v634, %v638
    %v643 = vand.u32 2147483647, %v633
    %vm644 = vcmp.eq.f32.partialorder %v643, 8.507059e+37
    %v645 = vand.u32 %v633, 2147483648
    %v646 = vor.u32 1.1754944e-38, %v645
    %v647 = vsel %vm644, %v646, %v642
    %v648 = vmul.f32 1.0, %v647
    %v649 = vtanh.pop %v629
    %v650 = vmul.f32 %v648, %v597
    %652 = vrot.lane.b32.xlu0 %v649, 32
    %v653 = vpop.permute.xlu0 %652
    %v655 = vmul.f32 %v648, %v653
    %657 = vrot.lane.b32.xlu0 %v655, 32
    %v658 = vpop.permute.xlu0 %657
    %v660 = vadd.f32 %v650, %v658
    %v661 = vtanh.pop %v660
    %663 = vrot.lane.b32.xlu0 %v661, 32
    %v664 = vpop.permute.xlu0 %663
    %v666 = vmul.f32 %v648, %v664
    %668 = vrot.lane.b32.xlu0 %v666, 64
    %v669 = vpop.permute.xlu0 %668
    %671 = vst.msk [vmem:[#allocation2 + $0x30] sm:$0xff] %vm170, %v669
    %v672 = vpack.c.bf16 %v666, %v666
    %674 = vrot.lane.b32.xlu0 %v672, 64
    %v675 = vpop.permute.xlu0 %674
    %v677 = vsel %vm170, %v675, 0
    %679 = vmatpush.bf16.msra.mxu0 0
    %680 = vmatpush.bf16.msra.mxu0 0
    %681 = vmatpush.bf16.msra.mxu0 0
    %682 = vmatpush.bf16.msra.mxu0 0
    %683 = vmatpush.bf16.msra.mxu0 0
    %684 = vmatpush.bf16.msra.mxu0 0
    %685 = vmatpush.bf16.msra.mxu0 %v228
    %686 = vmatpush.bf16.msra.mxu0 %v227
    %687 = vmatmul.bf16.gmra.mxu0 %v677
    %v688 = vpop.f32.mrf.mxu0
    %v689 = vadd.f32 0.0, %v688
    %v690 = vpop.f32.mrf.mxu0
    %691 = vdwg.mxu0
    %v692 = vadd.f32 %v210, %v689
    %v693 = vxor.u32 %v692, 2147483648
    %v694 = vmul.f32 %v693, 1.442695
    %v695 = vpow.pop %v694
    %v696 = vadd.f32 %v695, 1.0
    %v697 = vrcp.pop %v696
    %v698 = vmul.f32 %v696, %v697
    %v699 = vsub.f32 1.0, %v698
    %v700 = vmul.f32 %v697, %v699
    %v701 = vadd.f32 %v697, %v700
    %vm702 = vweird.f32 %v696
    %vm703 = vweird.f32 %v697
    %vm704 = vmor %vm702, %vm703
    %v705 = vsel %vm704, %v697, %v701
    %v706 = vand.u32 2147483647, %v696
    %vm707 = vcmp.eq.f32.partialorder %v706, 8.507059e+37
    %v708 = vand.u32 %v696, 2147483648
    %v709 = vor.u32 1.1754944e-38, %v708
    %v710 = vsel %vm707, %v709, %v705
    %v711 = vmul.f32 1.0, %v710
    %v712 = vtanh.pop %v692
    %v713 = vmul.f32 %v711, %v660
    %715 = vrot.lane.b32.xlu0 %v712, 32
    %v716 = vpop.permute.xlu0 %715
    %v718 = vmul.f32 %v711, %v716
    %720 = vrot.lane.b32.xlu0 %v718, 32
    %v721 = vpop.permute.xlu0 %720
    %v723 = vadd.f32 %v713, %v721
    %v724 = vtanh.pop %v723
    %726 = vrot.lane.b32.xlu0 %v724, 32
    %v727 = vpop.permute.xlu0 %726
    %v729 = vmul.f32 %v711, %v727
    %731 = vrot.lane.b32.xlu0 %v729, 64
    %v732 = vpop.permute.xlu0 %731
    %734 = vst.msk [vmem:[#allocation2 + $0x38] sm:$0xff] %vm170, %v732
    %735 = vst.msk [vmem:[#allocation13] sm:$0xff] %vm170, %v732
    %737 = vrot.lane.b32.xlu0 %v723, 96
    %v738 = vpop.permute.xlu0 %737
    %740 = vst.msk [vmem:[#allocation15] sm:$0xff] %vm170, %v738
    %v741 = vld [vmem:[#allocation2] sm:$0xff]
    %v742 = vld [vmem:[#allocation2 + $0x8] sm:$0xff]
    %v743 = vld [vmem:[#allocation2 + $0x10] sm:$0xff]
    %v744 = vld [vmem:[#allocation2 + $0x18] sm:$0xff]
    %v745 = vld [vmem:[#allocation2 + $0x20] sm:$0xff]
    %v746 = vld [vmem:[#allocation2 + $0x28] sm:$0xff]
    %v747 = vld [vmem:[#allocation2 + $0x30] sm:$0xff]
    %v748 = vld [vmem:[#allocation2 + $0x38] sm:$0xff]
    %v749 = vpack.c.bf16 %v742, %v741
    %v750 = vpack.c.bf16 %v744, %v743
    %v751 = vpack.c.bf16 %v746, %v745
    %v752 = vpack.c.bf16 %v748, %v747
    %v753 = vld [vmem:[%s4] sm:$0xf]
    %v754 = vld [vmem:[%s4 + $0x4] sm:$0xf]
    %v755 = vld [vmem:[%s4 + $0x8] sm:$0xf]
    %v756 = vld [vmem:[%s4 + $0xc] sm:$0xf]
    %v757 = vld [vmem:[%s6] sm:$0x1]
    %v759 = vperm.slane %v757, 0
    %v765 = vunpack.c.l.b16 %v753
    %v766 = vunpack.c.l.b16 %v754
    %v767 = vunpack.c.l.b16 %v755
    %v768 = vunpack.c.l.b16 %v756
    %v769 = vpack.c.b16 %v766, %v765
    %v770 = vpack.c.b16 %v768, %v767
    %v774 = vsel %vm170, %v749, 0
    %v777 = vsel %vm170, %v750, 0
    %v780 = vsel %vm170, %v751, 0
    %v783 = vsel %vm170, %v752, 0
    %785 = vmatpush.bf16.msra.mxu0 0
    %786 = vmatpush.bf16.msra.mxu0 0
    %787 = vmatpush.bf16.msra.mxu0 0
    %788 = vmatpush.bf16.msra.mxu0 0
    %789 = vmatpush.bf16.msra.mxu0 0
    %790 = vmatpush.bf16.msra.mxu0 0
    %791 = vmatpush.bf16.msra.mxu0 %v770
    %792 = vmatpush.bf16.msra.mxu0 %v769
    %793 = vmatmul.bf16.gmra.mxu0 %v774
    %v794 = vpop.f32.mrf.mxu0
    %v795 = vadd.f32 %v759, %v794
    %v796 = vpop.f32.mrf.mxu0
    %v797 = vadd.f32 %v759, %v796
    %798 = vmatmul.bf16.gmra.mxu0 %v777
    %v799 = vpop.f32.mrf.mxu0
    %v800 = vadd.f32 %v759, %v799
    %v801 = vpop.f32.mrf.mxu0
    %v802 = vadd.f32 %v759, %v801
    %803 = vmatmul.bf16.gmra.mxu0 %v780
    %v804 = vpop.f32.mrf.mxu0
    %v805 = vadd.f32 %v759, %v804
    %v806 = vpop.f32.mrf.mxu0
    %v807 = vadd.f32 %v759, %v806
    %808 = vmatmul.bf16.gmra.mxu0 %v783
    %v809 = vpop.f32.mrf.mxu0
    %v810 = vadd.f32 %v759, %v809
    %v811 = vpop.f32.mrf.mxu0
    %v812 = vadd.f32 %v759, %v811
    %813 = vdwg.mxu0
    %v814 = vld [vmem:[#allocation6] sm:$0xf]
    %v815 = vld [vmem:[#allocation6 + $0x4] sm:$0xf]
    %v816 = vld [vmem:[#allocation6 + $0x8] sm:$0xf]
    %v817 = vld [vmem:[#allocation6 + $0xc] sm:$0xf]
    %s818 = scalar_lea.vmem [#allocation8], 8
    %v819 = vld [vmem:[%s818] sm:$0xff]
    %s820 = scalar_lea.vmem [#allocation9], 8
    %v821 = vld [vmem:[%s820] sm:$0xff]
    %v822 = vpack.c.bf16 %v819, %v819
    %v827 = vunpack.c.l.b16 %v814
    %v828 = vunpack.c.l.b16 %v815
    %v829 = vunpack.c.l.b16 %v816
    %v830 = vunpack.c.l.b16 %v817
    %v831 = vpack.c.b16 %v828, %v827
    %v832 = vpack.c.b16 %v830, %v829
    %v836 = vsel %vm170, %v822, 0
    %838 = vmatpush.bf16.msra.mxu0 0
    %839 = vmatpush.bf16.msra.mxu0 0
    %840 = vmatpush.bf16.msra.mxu0 0
    %841 = vmatpush.bf16.msra.mxu0 0
    %842 = vmatpush.bf16.msra.mxu0 0
    %843 = vmatpush.bf16.msra.mxu0 0
    %844 = vmatpush.bf16.msra.mxu0 %v832
    %845 = vmatpush.bf16.msra.mxu0 %v831
    %846 = vmatmul.bf16.gmra.mxu0 %v836
    %v847 = vpop.f32.mrf.mxu0
    %v848 = vadd.f32 0.0, %v847
    %v849 = vpop.f32.mrf.mxu0
    %850 = vdwg.mxu0
    %v851 = vadd.f32 %v795, %v848
    %v852 = vxor.u32 %v851, 2147483648
    %v853 = vmul.f32 %v852, 1.442695
    %v854 = vpow.pop %v853
    %v855 = vadd.f32 %v854, 1.0
    %v856 = vrcp.pop %v855
    %v857 = vmul.f32 %v855, %v856
    %v858 = vsub.f32 1.0, %v857
    %v859 = vmul.f32 %v856, %v858
    %v860 = vadd.f32 %v856, %v859
    %vm861 = vweird.f32 %v855
    %vm862 = vweird.f32 %v856
    %vm863 = vmor %vm861, %vm862
    %v864 = vsel %vm863, %v856, %v860
    %v865 = vand.u32 2147483647, %v855
    %vm866 = vcmp.eq.f32.partialorder %v865, 8.507059e+37
    %v867 = vand.u32 %v855, 2147483648
    %v868 = vor.u32 1.1754944e-38, %v867
    %v869 = vsel %vm866, %v868, %v864
    %v870 = vmul.f32 1.0, %v869
    %v871 = vtanh.pop %v851
    %873 = vrot.lane.b32.xlu0 %v821, 32
    %v874 = vpop.permute.xlu0 %873
    %v876 = vmul.f32 %v870, %v874
    %878 = vrot.lane.b32.xlu0 %v871, 32
    %v879 = vpop.permute.xlu0 %878
    %v881 = vmul.f32 %v870, %v879
    %883 = vrot.lane.b32.xlu0 %v881, 32
    %v884 = vpop.permute.xlu0 %883
    %v886 = vadd.f32 %v876, %v884
    %v887 = vtanh.pop %v886
    %889 = vrot.lane.b32.xlu0 %v887, 32
    %v890 = vpop.permute.xlu0 %889
    %v892 = vmul.f32 %v870, %v890
    %894 = vrot.lane.b32.xlu0 %v892, 64
    %v895 = vpop.permute.xlu0 %894
    %897 = vst.msk [vmem:[#allocation2] sm:$0xff] %vm170, %v895
    %v898 = vpack.c.bf16 %v892, %v892
    %900 = vrot.lane.b32.xlu0 %v898, 64
    %v901 = vpop.permute.xlu0 %900
    %v903 = vsel %vm170, %v901, 0
    %905 = vmatpush.bf16.msra.mxu0 0
    %906 = vmatpush.bf16.msra.mxu0 0
    %907 = vmatpush.bf16.msra.mxu0 0
    %908 = vmatpush.bf16.msra.mxu0 0
    %909 = vmatpush.bf16.msra.mxu0 0
    %910 = vmatpush.bf16.msra.mxu0 0
    %911 = vmatpush.bf16.msra.mxu0 %v832
    %912 = vmatpush.bf16.msra.mxu0 %v831
    %913 = vmatmul.bf16.gmra.mxu0 %v903
    %v914 = vpop.f32.mrf.mxu0
    %v915 = vadd.f32 0.0, %v914
    %v916 = vpop.f32.mrf.mxu0
    %917 = vdwg.mxu0
    %v918 = vadd.f32 %v797, %v915
    %v919 = vxor.u32 %v918, 2147483648
    %v920 = vmul.f32 %v919, 1.442695
    %v921 = vpow.pop %v920
    %v922 = vadd.f32 %v921, 1.0
    %v923 = vrcp.pop %v922
    %v924 = vmul.f32 %v922, %v923
    %v925 = vsub.f32 1.0, %v924
    %v926 = vmul.f32 %v923, %v925
    %v927 = vadd.f32 %v923, %v926
    %vm928 = vweird.f32 %v922
    %vm929 = vweird.f32 %v923
    %vm930 = vmor %vm928, %vm929
    %v931 = vsel %vm930, %v923, %v927
    %v932 = vand.u32 2147483647, %v922
    %vm933 = vcmp.eq.f32.partialorder %v932, 8.507059e+37
    %v934 = vand.u32 %v922, 2147483648
    %v935 = vor.u32 1.1754944e-38, %v934
    %v936 = vsel %vm933, %v935, %v931
    %v937 = vmul.f32 1.0, %v936
    %v938 = vtanh.pop %v918
    %v939 = vmul.f32 %v937, %v886
    %941 = vrot.lane.b32.xlu0 %v938, 32
    %v942 = vpop.permute.xlu0 %941
    %v944 = vmul.f32 %v937, %v942
    %946 = vrot.lane.b32.xlu0 %v944, 32
    %v947 = vpop.permute.xlu0 %946
    %v949 = vadd.f32 %v939, %v947
    %v950 = vtanh.pop %v949
    %952 = vrot.lane.b32.xlu0 %v950, 32
    %v953 = vpop.permute.xlu0 %952
    %v955 = vmul.f32 %v937, %v953
    %957 = vrot.lane.b32.xlu0 %v955, 64
    %v958 = vpop.permute.xlu0 %957
    %960 = vst.msk [vmem:[#allocation2 + $0x8] sm:$0xff] %vm170, %v958
    %v961 = vpack.c.bf16 %v955, %v955
    %963 = vrot.lane.b32.xlu0 %v961, 64
    %v964 = vpop.permute.xlu0 %963
    %v966 = vsel %vm170, %v964, 0
    %968 = vmatpush.bf16.msra.mxu0 0
    %969 = vmatpush.bf16.msra.mxu0 0
    %970 = vmatpush.bf16.msra.mxu0 0
    %971 = vmatpush.bf16.msra.mxu0 0
    %972 = vmatpush.bf16.msra.mxu0 0
    %973 = vmatpush.bf16.msra.mxu0 0
    %974 = vmatpush.bf16.msra.mxu0 %v832
    %975 = vmatpush.bf16.msra.mxu0 %v831
    %976 = vmatmul.bf16.gmra.mxu0 %v966
    %v977 = vpop.f32.mrf.mxu0
    %v978 = vadd.f32 0.0, %v977
    %v979 = vpop.f32.mrf.mxu0
    %980 = vdwg.mxu0
    %v981 = vadd.f32 %v800, %v978
    %v982 = vxor.u32 %v981, 2147483648
    %v983 = vmul.f32 %v982, 1.442695
    %v984 = vpow.pop %v983
    %v985 = vadd.f32 %v984, 1.0
    %v986 = vrcp.pop %v985
    %v987 = vmul.f32 %v985, %v986
    %v988 = vsub.f32 1.0, %v987
    %v989 = vmul.f32 %v986, %v988
    %v990 = vadd.f32 %v986, %v989
    %vm991 = vweird.f32 %v985
    %vm992 = vweird.f32 %v986
    %vm993 = vmor %vm991, %vm992
    %v994 = vsel %vm993, %v986, %v990
    %v995 = vand.u32 2147483647, %v985
    %vm996 = vcmp.eq.f32.partialorder %v995, 8.507059e+37
    %v997 = vand.u32 %v985, 2147483648
    %v998 = vor.u32 1.1754944e-38, %v997
    %v999 = vsel %vm996, %v998, %v994
    %v1000 = vmul.f32 1.0, %v999
    %v1001 = vtanh.pop %v981
    %v1002 = vmul.f32 %v1000, %v949
    %1004 = vrot.lane.b32.xlu0 %v1001, 32
    %v1005 = vpop.permute.xlu0 %1004
    %v1007 = vmul.f32 %v1000, %v1005
    %1009 = vrot.lane.b32.xlu0 %v1007, 32
    %v1010 = vpop.permute.xlu0 %1009
    %v1012 = vadd.f32 %v1002, %v1010
    %v1013 = vtanh.pop %v1012
    %1015 = vrot.lane.b32.xlu0 %v1013, 32
    %v1016 = vpop.permute.xlu0 %1015
    %v1018 = vmul.f32 %v1000, %v1016
    %1020 = vrot.lane.b32.xlu0 %v1018, 64
    %v1021 = vpop.permute.xlu0 %1020
    %1023 = vst.msk [vmem:[#allocation2 + $0x10] sm:$0xff] %vm170, %v1021
    %v1024 = vpack.c.bf16 %v1018, %v1018
    %1026 = vrot.lane.b32.xlu0 %v1024, 64
    %v1027 = vpop.permute.xlu0 %1026
    %v1029 = vsel %vm170, %v1027, 0
    %1031 = vmatpush.bf16.msra.mxu0 0
    %1032 = vmatpush.bf16.msra.mxu0 0
    %1033 = vmatpush.bf16.msra.mxu0 0
    %1034 = vmatpush.bf16.msra.mxu0 0
    %1035 = vmatpush.bf16.msra.mxu0 0
    %1036 = vmatpush.bf16.msra.mxu0 0
    %1037 = vmatpush.bf16.msra.mxu0 %v832
    %1038 = vmatpush.bf16.msra.mxu0 %v831
    %1039 = vmatmul.bf16.gmra.mxu0 %v1029
    %v1040 = vpop.f32.mrf.mxu0
    %v1041 = vadd.f32 0.0, %v1040
    %v1042 = vpop.f32.mrf.mxu0
    %1043 = vdwg.mxu0
    %v1044 = vadd.f32 %v802, %v1041
    %v1045 = vxor.u32 %v1044, 2147483648
    %v1046 = vmul.f32 %v1045, 1.442695
    %v1047 = vpow.pop %v1046
    %v1048 = vadd.f32 %v1047, 1.0
    %v1049 = vrcp.pop %v1048
    %v1050 = vmul.f32 %v1048, %v1049
    %v1051 = vsub.f32 1.0, %v1050
    %v1052 = vmul.f32 %v1049, %v1051
    %v1053 = vadd.f32 %v1049, %v1052
    %vm1054 = vweird.f32 %v1048
    %vm1055 = vweird.f32 %v1049
    %vm1056 = vmor %vm1054, %vm1055
    %v1057 = vsel %vm1056, %v1049, %v1053
    %v1058 = vand.u32 2147483647, %v1048
    %vm1059 = vcmp.eq.f32.partialorder %v1058, 8.507059e+37
    %v1060 = vand.u32 %v1048, 2147483648
    %v1061 = vor.u32 1.1754944e-38, %v1060
    %v1062 = vsel %vm1059, %v1061, %v1057
    %v1063 = vmul.f32 1.0, %v1062
    %v1064 = vtanh.pop %v1044
    %v1065 = vmul.f32 %v1063, %v1012
    %1067 = vrot.lane.b32.xlu0 %v1064, 32
    %v1068 = vpop.permute.xlu0 %1067
    %v1070 = vmul.f32 %v1063, %v1068
    %1072 = vrot.lane.b32.xlu0 %v1070, 32
    %v1073 = vpop.permute.xlu0 %1072
    %v1075 = vadd.f32 %v1065, %v1073
    %v1076 = vtanh.pop %v1075
    %1078 = vrot.lane.b32.xlu0 %v1076, 32
    %v1079 = vpop.permute.xlu0 %1078
    %v1081 = vmul.f32 %v1063, %v1079
    %1083 = vrot.lane.b32.xlu0 %v1081, 64
    %v1084 = vpop.permute.xlu0 %1083
    %1086 = vst.msk [vmem:[#allocation2 + $0x18] sm:$0xff] %vm170, %v1084
    %v1087 = vpack.c.bf16 %v1081, %v1081
    %1089 = vrot.lane.b32.xlu0 %v1087, 64
    %v1090 = vpop.permute.xlu0 %1089
    %v1092 = vsel %vm170, %v1090, 0
    %1094 = vmatpush.bf16.msra.mxu0 0
    %1095 = vmatpush.bf16.msra.mxu0 0
    %1096 = vmatpush.bf16.msra.mxu0 0
    %1097 = vmatpush.bf16.msra.mxu0 0
    %1098 = vmatpush.bf16.msra.mxu0 0
    %1099 = vmatpush.bf16.msra.mxu0 0
    %1100 = vmatpush.bf16.msra.mxu0 %v832
    %1101 = vmatpush.bf16.msra.mxu0 %v831
    %1102 = vmatmul.bf16.gmra.mxu0 %v1092
    %v1103 = vpop.f32.mrf.mxu0
    %v1104 = vadd.f32 0.0, %v1103
    %v1105 = vpop.f32.mrf.mxu0
    %1106 = vdwg.mxu0
    %v1107 = vadd.f32 %v805, %v1104
    %v1108 = vxor.u32 %v1107, 2147483648
    %v1109 = vmul.f32 %v1108, 1.442695
    %v1110 = vpow.pop %v1109
    %v1111 = vadd.f32 %v1110, 1.0
    %v1112 = vrcp.pop %v1111
    %v1113 = vmul.f32 %v1111, %v1112
    %v1114 = vsub.f32 1.0, %v1113
    %v1115 = vmul.f32 %v1112, %v1114
    %v1116 = vadd.f32 %v1112, %v1115
    %vm1117 = vweird.f32 %v1111
    %vm1118 = vweird.f32 %v1112
    %vm1119 = vmor %vm1117, %vm1118
    %v1120 = vsel %vm1119, %v1112, %v1116
    %v1121 = vand.u32 2147483647, %v1111
    %vm1122 = vcmp.eq.f32.partialorder %v1121, 8.507059e+37
    %v1123 = vand.u32 %v1111, 2147483648
    %v1124 = vor.u32 1.1754944e-38, %v1123
    %v1125 = vsel %vm1122, %v1124, %v1120
    %v1126 = vmul.f32 1.0, %v1125
    %v1127 = vtanh.pop %v1107
    %v1128 = vmul.f32 %v1126, %v1075
    %1130 = vrot.lane.b32.xlu0 %v1127, 32
    %v1131 = vpop.permute.xlu0 %1130
    %v1133 = vmul.f32 %v1126, %v1131
    %1135 = vrot.lane.b32.xlu0 %v1133, 32
    %v1136 = vpop.permute.xlu0 %1135
    %v1138 = vadd.f32 %v1128, %v1136
    %v1139 = vtanh.pop %v1138
    %1141 = vrot.lane.b32.xlu0 %v1139, 32
    %v1142 = vpop.permute.xlu0 %1141
    %v1144 = vmul.f32 %v1126, %v1142
    %1146 = vrot.lane.b32.xlu0 %v1144, 64
    %v1147 = vpop.permute.xlu0 %1146
    %1149 = vst.msk [vmem:[#allocation2 + $0x20] sm:$0xff] %vm170, %v1147
    %v1150 = vpack.c.bf16 %v1144, %v1144
    %1152 = vrot.lane.b32.xlu0 %v1150, 64
    %v1153 = vpop.permute.xlu0 %1152
    %v1155 = vsel %vm170, %v1153, 0
    %1157 = vmatpush.bf16.msra.mxu0 0
    %1158 = vmatpush.bf16.msra.mxu0 0
    %1159 = vmatpush.bf16.msra.mxu0 0
    %1160 = vmatpush.bf16.msra.mxu0 0
    %1161 = vmatpush.bf16.msra.mxu0 0
    %1162 = vmatpush.bf16.msra.mxu0 0
    %1163 = vmatpush.bf16.msra.mxu0 %v832
    %1164 = vmatpush.bf16.msra.mxu0 %v831
    %1165 = vmatmul.bf16.gmra.mxu0 %v1155
    %v1166 = vpop.f32.mrf.mxu0
    %v1167 = vadd.f32 0.0, %v1166
    %v1168 = vpop.f32.mrf.mxu0
    %1169 = vdwg.mxu0
    %v1170 = vadd.f32 %v807, %v1167
    %v1171 = vxor.u32 %v1170, 2147483648
    %v1172 = vmul.f32 %v1171, 1.442695
    %v1173 = vpow.pop %v1172
    %v1174 = vadd.f32 %v1173, 1.0
    %v1175 = vrcp.pop %v1174
    %v1176 = vmul.f32 %v1174, %v1175
    %v1177 = vsub.f32 1.0, %v1176
    %v1178 = vmul.f32 %v1175, %v1177
    %v1179 = vadd.f32 %v1175, %v1178
    %vm1180 = vweird.f32 %v1174
    %vm1181 = vweird.f32 %v1175
    %vm1182 = vmor %vm1180, %vm1181
    %v1183 = vsel %vm1182, %v1175, %v1179
    %v1184 = vand.u32 2147483647, %v1174
    %vm1185 = vcmp.eq.f32.partialorder %v1184, 8.507059e+37
    %v1186 = vand.u32 %v1174, 2147483648
    %v1187 = vor.u32 1.1754944e-38, %v1186
    %v1188 = vsel %vm1185, %v1187, %v1183
    %v1189 = vmul.f32 1.0, %v1188
    %v1190 = vtanh.pop %v1170
    %v1191 = vmul.f32 %v1189, %v1138
    %1193 = vrot.lane.b32.xlu0 %v1190, 32
    %v1194 = vpop.permute.xlu0 %1193
    %v1196 = vmul.f32 %v1189, %v1194
    %1198 = vrot.lane.b32.xlu0 %v1196, 32
    %v1199 = vpop.permute.xlu0 %1198
    %v1201 = vadd.f32 %v1191, %v1199
    %v1202 = vtanh.pop %v1201
    %1204 = vrot.lane.b32.xlu0 %v1202, 32
    %v1205 = vpop.permute.xlu0 %1204
    %v1207 = vmul.f32 %v1189, %v1205
    %1209 = vrot.lane.b32.xlu0 %v1207, 64
    %v1210 = vpop.permute.xlu0 %1209
    %1212 = vst.msk [vmem:[#allocation2 + $0x28] sm:$0xff] %vm170, %v1210
    %v1213 = vpack.c.bf16 %v1207, %v1207
    %1215 = vrot.lane.b32.xlu0 %v1213, 64
    %v1216 = vpop.permute.xlu0 %1215
    %v1218 = vsel %vm170, %v1216, 0
    %1220 = vmatpush.bf16.msra.mxu0 0
    %1221 = vmatpush.bf16.msra.mxu0 0
    %1222 = vmatpush.bf16.msra.mxu0 0
    %1223 = vmatpush.bf16.msra.mxu0 0
    %1224 = vmatpush.bf16.msra.mxu0 0
    %1225 = vmatpush.bf16.msra.mxu0 0
    %1226 = vmatpush.bf16.msra.mxu0 %v832
    %1227 = vmatpush.bf16.msra.mxu0 %v831
    %1228 = vmatmul.bf16.gmra.mxu0 %v1218
    %v1229 = vpop.f32.mrf.mxu0
    %v1230 = vadd.f32 0.0, %v1229
    %v1231 = vpop.f32.mrf.mxu0
    %1232 = vdwg.mxu0
    %v1233 = vadd.f32 %v810, %v1230
    %v1234 = vxor.u32 %v1233, 2147483648
    %v1235 = vmul.f32 %v1234, 1.442695
    %v1236 = vpow.pop %v1235
    %v1237 = vadd.f32 %v1236, 1.0
    %v1238 = vrcp.pop %v1237
    %v1239 = vmul.f32 %v1237, %v1238
    %v1240 = vsub.f32 1.0, %v1239
    %v1241 = vmul.f32 %v1238, %v1240
    %v1242 = vadd.f32 %v1238, %v1241
    %vm1243 = vweird.f32 %v1237
    %vm1244 = vweird.f32 %v1238
    %vm1245 = vmor %vm1243, %vm1244
    %v1246 = vsel %vm1245, %v1238, %v1242
    %v1247 = vand.u32 2147483647, %v1237
    %vm1248 = vcmp.eq.f32.partialorder %v1247, 8.507059e+37
    %v1249 = vand.u32 %v1237, 2147483648
    %v1250 = vor.u32 1.1754944e-38, %v1249
    %v1251 = vsel %vm1248, %v1250, %v1246
    %v1252 = vmul.f32 1.0, %v1251
    %v1253 = vtanh.pop %v1233
    %v1254 = vmul.f32 %v1252, %v1201
    %1256 = vrot.lane.b32.xlu0 %v1253, 32
    %v1257 = vpop.permute.xlu0 %1256
    %v1259 = vmul.f32 %v1252, %v1257
    %1261 = vrot.lane.b32.xlu0 %v1259, 32
    %v1262 = vpop.permute.xlu0 %1261
    %v1264 = vadd.f32 %v1254, %v1262
    %v1265 = vtanh.pop %v1264
    %1267 = vrot.lane.b32.xlu0 %v1265, 32
    %v1268 = vpop.permute.xlu0 %1267
    %v1270 = vmul.f32 %v1252, %v1268
    %1272 = vrot.lane.b32.xlu0 %v1270, 64
    %v1273 = vpop.permute.xlu0 %1272
    %1275 = vst.msk [vmem:[#allocation2 + $0x30] sm:$0xff] %vm170, %v1273
    %v1276 = vpack.c.bf16 %v1270, %v1270
    %1278 = vrot.lane.b32.xlu0 %v1276, 64
    %v1279 = vpop.permute.xlu0 %1278
    %v1281 = vsel %vm170, %v1279, 0
    %1283 = vmatpush.bf16.msra.mxu0 0
    %1284 = vmatpush.bf16.msra.mxu0 0
    %1285 = vmatpush.bf16.msra.mxu0 0
    %1286 = vmatpush.bf16.msra.mxu0 0
    %1287 = vmatpush.bf16.msra.mxu0 0
    %1288 = vmatpush.bf16.msra.mxu0 0
    %1289 = vmatpush.bf16.msra.mxu0 %v832
    %1290 = vmatpush.bf16.msra.mxu0 %v831
    %1291 = vmatmul.bf16.gmra.mxu0 %v1281
    %v1292 = vpop.f32.mrf.mxu0
    %v1293 = vadd.f32 0.0, %v1292
    %v1294 = vpop.f32.mrf.mxu0
    %1295 = vdwg.mxu0
    %v1296 = vadd.f32 %v812, %v1293
    %v1297 = vxor.u32 %v1296, 2147483648
    %v1298 = vmul.f32 %v1297, 1.442695
    %v1299 = vpow.pop %v1298
    %v1300 = vadd.f32 %v1299, 1.0
    %v1301 = vrcp.pop %v1300
    %v1302 = vmul.f32 %v1300, %v1301
    %v1303 = vsub.f32 1.0, %v1302
    %v1304 = vmul.f32 %v1301, %v1303
    %v1305 = vadd.f32 %v1301, %v1304
    %vm1306 = vweird.f32 %v1300
    %vm1307 = vweird.f32 %v1301
    %vm1308 = vmor %vm1306, %vm1307
    %v1309 = vsel %vm1308, %v1301, %v1305
    %v1310 = vand.u32 2147483647, %v1300
    %vm1311 = vcmp.eq.f32.partialorder %v1310, 8.507059e+37
    %v1312 = vand.u32 %v1300, 2147483648
    %v1313 = vor.u32 1.1754944e-38, %v1312
    %v1314 = vsel %vm1311, %v1313, %v1309
    %v1315 = vmul.f32 1.0, %v1314
    %v1316 = vtanh.pop %v1296
    %v1317 = vmul.f32 %v1315, %v1264
    %1319 = vrot.lane.b32.xlu0 %v1316, 32
    %v1320 = vpop.permute.xlu0 %1319
    %v1322 = vmul.f32 %v1315, %v1320
    %1324 = vrot.lane.b32.xlu0 %v1322, 32
    %v1325 = vpop.permute.xlu0 %1324
    %v1327 = vadd.f32 %v1317, %v1325
    %v1328 = vtanh.pop %v1327
    %1330 = vrot.lane.b32.xlu0 %v1328, 32
    %v1331 = vpop.permute.xlu0 %1330
    %v1333 = vmul.f32 %v1315, %v1331
    %1335 = vrot.lane.b32.xlu0 %v1333, 64
    %v1336 = vpop.permute.xlu0 %1335
    %1338 = vst.msk [vmem:[#allocation2 + $0x38] sm:$0xff] %vm170, %v1336
    %s1339 = scalar_lea.vmem [#allocation13], 8
    %1340 = vst.msk [vmem:[%s1339] sm:$0xff] %vm170, %v1336
    %1342 = vrot.lane.b32.xlu0 %v1327, 96
    %v1343 = vpop.permute.xlu0 %1342
    %s1345 = scalar_lea.vmem [#allocation15], 8
    %1346 = vst.msk [vmem:[%s1345] sm:$0xff] %vm170, %v1343
    %v1347 = vld [vmem:[#allocation2] sm:$0xff]
    %v1348 = vld [vmem:[#allocation2 + $0x8] sm:$0xff]
    %v1349 = vld [vmem:[#allocation2 + $0x10] sm:$0xff]
    %v1350 = vld [vmem:[#allocation2 + $0x18] sm:$0xff]
    %v1351 = vld [vmem:[#allocation2 + $0x20] sm:$0xff]
    %v1352 = vld [vmem:[#allocation2 + $0x28] sm:$0xff]
    %v1353 = vld [vmem:[#allocation2 + $0x30] sm:$0xff]
    %v1354 = vld [vmem:[#allocation2 + $0x38] sm:$0xff]
    %v1355 = vpack.c.bf16 %v1348, %v1347
    %v1356 = vpack.c.bf16 %v1350, %v1349
    %v1357 = vpack.c.bf16 %v1352, %v1351
    %v1358 = vpack.c.bf16 %v1354, %v1353
    %s1359 = scalar_lea.vmem %s4, 16
    %v1360 = vld [vmem:[%s1359] sm:$0xf]
    %v1361 = vld [vmem:[%s1359 + $0x4] sm:$0xf]
    %v1362 = vld [vmem:[%s1359 + $0x8] sm:$0xf]
    %v1363 = vld [vmem:[%s1359 + $0xc] sm:$0xf]
    %s1364 = scalar_lea.vmem %s6, 1
    %v1365 = vld [vmem:[%s1364] sm:$0x1]
    %v1367 = vperm.slane %v1365, 0
    %v1373 = vunpack.c.l.b16 %v1360
    %v1374 = vunpack.c.l.b16 %v1361
    %v1375 = vunpack.c.l.b16 %v1362
    %v1376 = vunpack.c.l.b16 %v1363
    %v1377 = vpack.c.b16 %v1374, %v1373
    %v1378 = vpack.c.b16 %v1376, %v1375
    %v1382 = vsel %vm170, %v1355, 0
    %v1385 = vsel %vm170, %v1356, 0
    %v1388 = vsel %vm170, %v1357, 0
    %v1391 = vsel %vm170, %v1358, 0
    %1393 = vmatpush.bf16.msra.mxu0 0
    %1394 = vmatpush.bf16.msra.mxu0 0
    %1395 = vmatpush.bf16.msra.mxu0 0
    %1396 = vmatpush.bf16.msra.mxu0 0
    %1397 = vmatpush.bf16.msra.mxu0 0
    %1398 = vmatpush.bf16.msra.mxu0 0
    %1399 = vmatpush.bf16.msra.mxu0 %v1378
    %1400 = vmatpush.bf16.msra.mxu0 %v1377
    %1401 = vmatmul.bf16.gmra.mxu0 %v1382
    %v1402 = vpop.f32.mrf.mxu0
    %v1403 = vadd.f32 %v1367, %v1402
    %v1404 = vpop.f32.mrf.mxu0
    %v1405 = vadd.f32 %v1367, %v1404
    %1406 = vmatmul.bf16.gmra.mxu0 %v1385
    %v1407 = vpop.f32.mrf.mxu0
    %v1408 = vadd.f32 %v1367, %v1407
    %v1409 = vpop.f32.mrf.mxu0
    %v1410 = vadd.f32 %v1367, %v1409
    %1411 = vmatmul.bf16.gmra.mxu0 %v1388
    %v1412 = vpop.f32.mrf.mxu0
    %v1413 = vadd.f32 %v1367, %v1412
    %v1414 = vpop.f32.mrf.mxu0
    %v1415 = vadd.f32 %v1367, %v1414
    %1416 = vmatmul.bf16.gmra.mxu0 %v1391
    %v1417 = vpop.f32.mrf.mxu0
    %v1418 = vadd.f32 %v1367, %v1417
    %v1419 = vpop.f32.mrf.mxu0
    %v1420 = vadd.f32 %v1367, %v1419
    %1421 = vdwg.mxu0
    %s1422 = scalar_lea.vmem [#allocation6], 16
    %v1423 = vld [vmem:[%s1422] sm:$0xf]
    %v1424 = vld [vmem:[%s1422 + $0x4] sm:$0xf]
    %v1425 = vld [vmem:[%s1422 + $0x8] sm:$0xf]
    %v1426 = vld [vmem:[%s1422 + $0xc] sm:$0xf]
    %s1427 = scalar_lea.vmem [#allocation8], 16
    %v1428 = vld [vmem:[%s1427] sm:$0xff]
    %s1429 = scalar_lea.vmem [#allocation9], 16
    %v1430 = vld [vmem:[%s1429] sm:$0xff]
    %v1431 = vpack.c.bf16 %v1428, %v1428
    %v1436 = vunpack.c.l.b16 %v1423
    %v1437 = vunpack.c.l.b16 %v1424
    %v1438 = vunpack.c.l.b16 %v1425
    %v1439 = vunpack.c.l.b16 %v1426
    %v1440 = vpack.c.b16 %v1437, %v1436
    %v1441 = vpack.c.b16 %v1439, %v1438
    %v1445 = vsel %vm170, %v1431, 0
    %1447 = vmatpush.bf16.msra.mxu0 0
    %1448 = vmatpush.bf16.msra.mxu0 0
    %1449 = vmatpush.bf16.msra.mxu0 0
    %1450 = vmatpush.bf16.msra.mxu0 0
    %1451 = vmatpush.bf16.msra.mxu0 0
    %1452 = vmatpush.bf16.msra.mxu0 0
    %1453 = vmatpush.bf16.msra.mxu0 %v1441
    %1454 = vmatpush.bf16.msra.mxu0 %v1440
    %1455 = vmatmul.bf16.gmra.mxu0 %v1445
    %v1456 = vpop.f32.mrf.mxu0
    %v1457 = vadd.f32 0.0, %v1456
    %v1458 = vpop.f32.mrf.mxu0
    %1459 = vdwg.mxu0
    %v1460 = vadd.f32 %v1403, %v1457
    %v1461 = vxor.u32 %v1460, 2147483648
    %v1462 = vmul.f32 %v1461, 1.442695
    %v1463 = vpow.pop %v1462
    %v1464 = vadd.f32 %v1463, 1.0
    %v1465 = vrcp.pop %v1464
    %v1466 = vmul.f32 %v1464, %v1465
    %v1467 = vsub.f32 1.0, %v1466
    %v1468 = vmul.f32 %v1465, %v1467
    %v1469 = vadd.f32 %v1465, %v1468
    %vm1470 = vweird.f32 %v1464
    %vm1471 = vweird.f32 %v1465
    %vm1472 = vmor %vm1470, %vm1471
    %v1473 = vsel %vm1472, %v1465, %v1469
    %v1474 = vand.u32 2147483647, %v1464
    %vm1475 = vcmp.eq.f32.partialorder %v1474, 8.507059e+37
    %v1476 = vand.u32 %v1464, 2147483648
    %v1477 = vor.u32 1.1754944e-38, %v1476
    %v1478 = vsel %vm1475, %v1477, %v1473
    %v1479 = vmul.f32 1.0, %v1478
    %v1480 = vtanh.pop %v1460
    %1482 = vrot.lane.b32.xlu0 %v1430, 32
    %v1483 = vpop.permute.xlu0 %1482
    %v1485 = vmul.f32 %v1479, %v1483
    %1487 = vrot.lane.b32.xlu0 %v1480, 32
    %v1488 = vpop.permute.xlu0 %1487
    %v1490 = vmul.f32 %v1479, %v1488
    %1492 = vrot.lane.b32.xlu0 %v1490, 32
    %v1493 = vpop.permute.xlu0 %1492
    %v1495 = vadd.f32 %v1485, %v1493
    %v1496 = vtanh.pop %v1495
    %1498 = vrot.lane.b32.xlu0 %v1496, 32
    %v1499 = vpop.permute.xlu0 %1498
    %v1501 = vmul.f32 %v1479, %v1499
    %v1502 = vpack.c.bf16 %v1501, %v1501
    %1504 = vrot.lane.b32.xlu0 %v1502, 64
    %v1505 = vpop.permute.xlu0 %1504
    %v1507 = vsel %vm170, %v1505, 0
    %1509 = vmatpush.bf16.msra.mxu0 0
    %1510 = vmatpush.bf16.msra.mxu0 0
    %1511 = vmatpush.bf16.msra.mxu0 0
    %1512 = vmatpush.bf16.msra.mxu0 0
    %1513 = vmatpush.bf16.msra.mxu0 0
    %1514 = vmatpush.bf16.msra.mxu0 0
    %1515 = vmatpush.bf16.msra.mxu0 %v1441
    %1516 = vmatpush.bf16.msra.mxu0 %v1440
    %1517 = vmatmul.bf16.gmra.mxu0 %v1507
    %v1518 = vpop.f32.mrf.mxu0
    %v1519 = vadd.f32 0.0, %v1518
    %v1520 = vpop.f32.mrf.mxu0
    %1521 = vdwg.mxu0
    %v1522 = vadd.f32 %v1405, %v1519
    %v1523 = vxor.u32 %v1522, 2147483648
    %v1524 = vmul.f32 %v1523, 1.442695
    %v1525 = vpow.pop %v1524
    %v1526 = vadd.f32 %v1525, 1.0
    %v1527 = vrcp.pop %v1526
    %v1528 = vmul.f32 %v1526, %v1527
    %v1529 = vsub.f32 1.0, %v1528
    %v1530 = vmul.f32 %v1527, %v1529
    %v1531 = vadd.f32 %v1527, %v1530
    %vm1532 = vweird.f32 %v1526
    %vm1533 = vweird.f32 %v1527
    %vm1534 = vmor %vm1532, %vm1533
    %v1535 = vsel %vm1534, %v1527, %v1531
    %v1536 = vand.u32 2147483647, %v1526
    %vm1537 = vcmp.eq.f32.partialorder %v1536, 8.507059e+37
    %v1538 = vand.u32 %v1526, 2147483648
    %v1539 = vor.u32 1.1754944e-38, %v1538
    %v1540 = vsel %vm1537, %v1539, %v1535
    %v1541 = vmul.f32 1.0, %v1540
    %v1542 = vtanh.pop %v1522
    %v1543 = vmul.f32 %v1541, %v1495
    %1545 = vrot.lane.b32.xlu0 %v1542, 32
    %v1546 = vpop.permute.xlu0 %1545
    %v1548 = vmul.f32 %v1541, %v1546
    %1550 = vrot.lane.b32.xlu0 %v1548, 32
    %v1551 = vpop.permute.xlu0 %1550
    %v1553 = vadd.f32 %v1543, %v1551
    %v1554 = vtanh.pop %v1553
    %1556 = vrot.lane.b32.xlu0 %v1554, 32
    %v1557 = vpop.permute.xlu0 %1556
    %v1559 = vmul.f32 %v1541, %v1557
    %v1560 = vpack.c.bf16 %v1559, %v1559
    %1562 = vrot.lane.b32.xlu0 %v1560, 64
    %v1563 = vpop.permute.xlu0 %1562
    %v1565 = vsel %vm170, %v1563, 0
    %1567 = vmatpush.bf16.msra.mxu0 0
    %1568 = vmatpush.bf16.msra.mxu0 0
    %1569 = vmatpush.bf16.msra.mxu0 0
    %1570 = vmatpush.bf16.msra.mxu0 0
    %1571 = vmatpush.bf16.msra.mxu0 0
    %1572 = vmatpush.bf16.msra.mxu0 0
    %1573 = vmatpush.bf16.msra.mxu0 %v1441
    %1574 = vmatpush.bf16.msra.mxu0 %v1440
    %1575 = vmatmul.bf16.gmra.mxu0 %v1565
    %v1576 = vpop.f32.mrf.mxu0
    %v1577 = vadd.f32 0.0, %v1576
    %v1578 = vpop.f32.mrf.mxu0
    %1579 = vdwg.mxu0
    %v1580 = vadd.f32 %v1408, %v1577
    %v1581 = vxor.u32 %v1580, 2147483648
    %v1582 = vmul.f32 %v1581, 1.442695
    %v1583 = vpow.pop %v1582
    %v1584 = vadd.f32 %v1583, 1.0
    %v1585 = vrcp.pop %v1584
    %v1586 = vmul.f32 %v1584, %v1585
    %v1587 = vsub.f32 1.0, %v1586
    %v1588 = vmul.f32 %v1585, %v1587
    %v1589 = vadd.f32 %v1585, %v1588
    %vm1590 = vweird.f32 %v1584
    %vm1591 = vweird.f32 %v1585
    %vm1592 = vmor %vm1590, %vm1591
    %v1593 = vsel %vm1592, %v1585, %v1589
    %v1594 = vand.u32 2147483647, %v1584
    %vm1595 = vcmp.eq.f32.partialorder %v1594, 8.507059e+37
    %v1596 = vand.u32 %v1584, 2147483648
    %v1597 = vor.u32 1.1754944e-38, %v1596
    %v1598 = vsel %vm1595, %v1597, %v1593
    %v1599 = vmul.f32 1.0, %v1598
    %v1600 = vtanh.pop %v1580
    %v1601 = vmul.f32 %v1599, %v1553
    %1603 = vrot.lane.b32.xlu0 %v1600, 32
    %v1604 = vpop.permute.xlu0 %1603
    %v1606 = vmul.f32 %v1599, %v1604
    %1608 = vrot.lane.b32.xlu0 %v1606, 32
    %v1609 = vpop.permute.xlu0 %1608
    %v1611 = vadd.f32 %v1601, %v1609
    %v1612 = vtanh.pop %v1611
    %1614 = vrot.lane.b32.xlu0 %v1612, 32
    %v1615 = vpop.permute.xlu0 %1614
    %v1617 = vmul.f32 %v1599, %v1615
    %v1618 = vpack.c.bf16 %v1617, %v1617
    %1620 = vrot.lane.b32.xlu0 %v1618, 64
    %v1621 = vpop.permute.xlu0 %1620
    %v1623 = vsel %vm170, %v1621, 0
    %1625 = vmatpush.bf16.msra.mxu0 0
    %1626 = vmatpush.bf16.msra.mxu0 0
    %1627 = vmatpush.bf16.msra.mxu0 0
    %1628 = vmatpush.bf16.msra.mxu0 0
    %1629 = vmatpush.bf16.msra.mxu0 0
    %1630 = vmatpush.bf16.msra.mxu0 0
    %1631 = vmatpush.bf16.msra.mxu0 %v1441
    %1632 = vmatpush.bf16.msra.mxu0 %v1440
    %1633 = vmatmul.bf16.gmra.mxu0 %v1623
    %v1634 = vpop.f32.mrf.mxu0
    %v1635 = vadd.f32 0.0, %v1634
    %v1636 = vpop.f32.mrf.mxu0
    %1637 = vdwg.mxu0
    %v1638 = vadd.f32 %v1410, %v1635
    %v1639 = vxor.u32 %v1638, 2147483648
    %v1640 = vmul.f32 %v1639, 1.442695
    %v1641 = vpow.pop %v1640
    %v1642 = vadd.f32 %v1641, 1.0
    %v1643 = vrcp.pop %v1642
    %v1644 = vmul.f32 %v1642, %v1643
    %v1645 = vsub.f32 1.0, %v1644
    %v1646 = vmul.f32 %v1643, %v1645
    %v1647 = vadd.f32 %v1643, %v1646
    %vm1648 = vweird.f32 %v1642
    %vm1649 = vweird.f32 %v1643
    %vm1650 = vmor %vm1648, %vm1649
    %v1651 = vsel %vm1650, %v1643, %v1647
    %v1652 = vand.u32 2147483647, %v1642
    %vm1653 = vcmp.eq.f32.partialorder %v1652, 8.507059e+37
    %v1654 = vand.u32 %v1642, 2147483648
    %v1655 = vor.u32 1.1754944e-38, %v1654
    %v1656 = vsel %vm1653, %v1655, %v1651
    %v1657 = vmul.f32 1.0, %v1656
    %v1658 = vtanh.pop %v1638
    %v1659 = vmul.f32 %v1657, %v1611
    %1661 = vrot.lane.b32.xlu0 %v1658, 32
    %v1662 = vpop.permute.xlu0 %1661
    %v1664 = vmul.f32 %v1657, %v1662
    %1666 = vrot.lane.b32.xlu0 %v1664, 32
    %v1667 = vpop.permute.xlu0 %1666
    %v1669 = vadd.f32 %v1659, %v1667
    %v1670 = vtanh.pop %v1669
    %1672 = vrot.lane.b32.xlu0 %v1670, 32
    %v1673 = vpop.permute.xlu0 %1672
    %v1675 = vmul.f32 %v1657, %v1673
    %v1676 = vpack.c.bf16 %v1675, %v1675
    %1678 = vrot.lane.b32.xlu0 %v1676, 64
    %v1679 = vpop.permute.xlu0 %1678
    %v1681 = vsel %vm170, %v1679, 0
    %1683 = vmatpush.bf16.msra.mxu0 0
    %1684 = vmatpush.bf16.msra.mxu0 0
    %1685 = vmatpush.bf16.msra.mxu0 0
    %1686 = vmatpush.bf16.msra.mxu0 0
    %1687 = vmatpush.bf16.msra.mxu0 0
    %1688 = vmatpush.bf16.msra.mxu0 0
    %1689 = vmatpush.bf16.msra.mxu0 %v1441
    %1690 = vmatpush.bf16.msra.mxu0 %v1440
    %1691 = vmatmul.bf16.gmra.mxu0 %v1681
    %v1692 = vpop.f32.mrf.mxu0
    %v1693 = vadd.f32 0.0, %v1692
    %v1694 = vpop.f32.mrf.mxu0
    %1695 = vdwg.mxu0
    %v1696 = vadd.f32 %v1413, %v1693
    %v1697 = vxor.u32 %v1696, 2147483648
    %v1698 = vmul.f32 %v1697, 1.442695
    %v1699 = vpow.pop %v1698
    %v1700 = vadd.f32 %v1699, 1.0
    %v1701 = vrcp.pop %v1700
    %v1702 = vmul.f32 %v1700, %v1701
    %v1703 = vsub.f32 1.0, %v1702
    %v1704 = vmul.f32 %v1701, %v1703
    %v1705 = vadd.f32 %v1701, %v1704
    %vm1706 = vweird.f32 %v1700
    %vm1707 = vweird.f32 %v1701
    %vm1708 = vmor %vm1706, %vm1707
    %v1709 = vsel %vm1708, %v1701, %v1705
    %v1710 = vand.u32 2147483647, %v1700
    %vm1711 = vcmp.eq.f32.partialorder %v1710, 8.507059e+37
    %v1712 = vand.u32 %v1700, 2147483648
    %v1713 = vor.u32 1.1754944e-38, %v1712
    %v1714 = vsel %vm1711, %v1713, %v1709
    %v1715 = vmul.f32 1.0, %v1714
    %v1716 = vtanh.pop %v1696
    %v1717 = vmul.f32 %v1715, %v1669
    %1719 = vrot.lane.b32.xlu0 %v1716, 32
    %v1720 = vpop.permute.xlu0 %1719
    %v1722 = vmul.f32 %v1715, %v1720
    %1724 = vrot.lane.b32.xlu0 %v1722, 32
    %v1725 = vpop.permute.xlu0 %1724
    %v1727 = vadd.f32 %v1717, %v1725
    %v1728 = vtanh.pop %v1727
    %1730 = vrot.lane.b32.xlu0 %v1728, 32
    %v1731 = vpop.permute.xlu0 %1730
    %v1733 = vmul.f32 %v1715, %v1731
    %v1734 = vpack.c.bf16 %v1733, %v1733
    %1736 = vrot.lane.b32.xlu0 %v1734, 64
    %v1737 = vpop.permute.xlu0 %1736
    %v1739 = vsel %vm170, %v1737, 0
    %1741 = vmatpush.bf16.msra.mxu0 0
    %1742 = vmatpush.bf16.msra.mxu0 0
    %1743 = vmatpush.bf16.msra.mxu0 0
    %1744 = vmatpush.bf16.msra.mxu0 0
    %1745 = vmatpush.bf16.msra.mxu0 0
    %1746 = vmatpush.bf16.msra.mxu0 0
    %1747 = vmatpush.bf16.msra.mxu0 %v1441
    %1748 = vmatpush.bf16.msra.mxu0 %v1440
    %1749 = vmatmul.bf16.gmra.mxu0 %v1739
    %v1750 = vpop.f32.mrf.mxu0
    %v1751 = vadd.f32 0.0, %v1750
    %v1752 = vpop.f32.mrf.mxu0
    %1753 = vdwg.mxu0
    %v1754 = vadd.f32 %v1415, %v1751
    %v1755 = vxor.u32 %v1754, 2147483648
    %v1756 = vmul.f32 %v1755, 1.442695
    %v1757 = vpow.pop %v1756
    %v1758 = vadd.f32 %v1757, 1.0
    %v1759 = vrcp.pop %v1758
    %v1760 = vmul.f32 %v1758, %v1759
    %v1761 = vsub.f32 1.0, %v1760
    %v1762 = vmul.f32 %v1759, %v1761
    %v1763 = vadd.f32 %v1759, %v1762
    %vm1764 = vweird.f32 %v1758
    %vm1765 = vweird.f32 %v1759
    %vm1766 = vmor %vm1764, %vm1765
    %v1767 = vsel %vm1766, %v1759, %v1763
    %v1768 = vand.u32 2147483647, %v1758
    %vm1769 = vcmp.eq.f32.partialorder %v1768, 8.507059e+37
    %v1770 = vand.u32 %v1758, 2147483648
    %v1771 = vor.u32 1.1754944e-38, %v1770
    %v1772 = vsel %vm1769, %v1771, %v1767
    %v1773 = vmul.f32 1.0, %v1772
    %v1774 = vtanh.pop %v1754
    %v1775 = vmul.f32 %v1773, %v1727
    %1777 = vrot.lane.b32.xlu0 %v1774, 32
    %v1778 = vpop.permute.xlu0 %1777
    %v1780 = vmul.f32 %v1773, %v1778
    %1782 = vrot.lane.b32.xlu0 %v1780, 32
    %v1783 = vpop.permute.xlu0 %1782
    %v1785 = vadd.f32 %v1775, %v1783
    %v1786 = vtanh.pop %v1785
    %1788 = vrot.lane.b32.xlu0 %v1786, 32
    %v1789 = vpop.permute.xlu0 %1788
    %v1791 = vmul.f32 %v1773, %v1789
    %v1792 = vpack.c.bf16 %v1791, %v1791
    %1794 = vrot.lane.b32.xlu0 %v1792, 64
    %v1795 = vpop.permute.xlu0 %1794
    %v1797 = vsel %vm170, %v1795, 0
    %1799 = vmatpush.bf16.msra.mxu0 0
    %1800 = vmatpush.bf16.msra.mxu0 0
    %1801 = vmatpush.bf16.msra.mxu0 0
    %1802 = vmatpush.bf16.msra.mxu0 0
    %1803 = vmatpush.bf16.msra.mxu0 0
    %1804 = vmatpush.bf16.msra.mxu0 0
    %1805 = vmatpush.bf16.msra.mxu0 %v1441
    %1806 = vmatpush.bf16.msra.mxu0 %v1440
    %1807 = vmatmul.bf16.gmra.mxu0 %v1797
    %v1808 = vpop.f32.mrf.mxu0
    %v1809 = vadd.f32 0.0, %v1808
    %v1810 = vpop.f32.mrf.mxu0
    %1811 = vdwg.mxu0
    %v1812 = vadd.f32 %v1418, %v1809
    %v1813 = vxor.u32 %v1812, 2147483648
    %v1814 = vmul.f32 %v1813, 1.442695
    %v1815 = vpow.pop %v1814
    %v1816 = vadd.f32 %v1815, 1.0
    %v1817 = vrcp.pop %v1816
    %v1818 = vmul.f32 %v1816, %v1817
    %v1819 = vsub.f32 1.0, %v1818
    %v1820 = vmul.f32 %v1817, %v1819
    %v1821 = vadd.f32 %v1817, %v1820
    %vm1822 = vweird.f32 %v1816
    %vm1823 = vweird.f32 %v1817
    %vm1824 = vmor %vm1822, %vm1823
    %v1825 = vsel %vm1824, %v1817, %v1821
    %v1826 = vand.u32 2147483647, %v1816
    %vm1827 = vcmp.eq.f32.partialorder %v1826, 8.507059e+37
    %v1828 = vand.u32 %v1816, 2147483648
    %v1829 = vor.u32 1.1754944e-38, %v1828
    %v1830 = vsel %vm1827, %v1829, %v1825
    %v1831 = vmul.f32 1.0, %v1830
    %v1832 = vtanh.pop %v1812
    %v1833 = vmul.f32 %v1831, %v1785
    %1835 = vrot.lane.b32.xlu0 %v1832, 32
    %v1836 = vpop.permute.xlu0 %1835
    %v1838 = vmul.f32 %v1831, %v1836
    %1840 = vrot.lane.b32.xlu0 %v1838, 32
    %v1841 = vpop.permute.xlu0 %1840
    %v1843 = vadd.f32 %v1833, %v1841
    %v1844 = vtanh.pop %v1843
    %1846 = vrot.lane.b32.xlu0 %v1844, 32
    %v1847 = vpop.permute.xlu0 %1846
    %v1849 = vmul.f32 %v1831, %v1847
    %v1850 = vpack.c.bf16 %v1849, %v1849
    %1852 = vrot.lane.b32.xlu0 %v1850, 64
    %v1853 = vpop.permute.xlu0 %1852
    %v1855 = vsel %vm170, %v1853, 0
    %1857 = vmatpush.bf16.msra.mxu0 0
    %1858 = vmatpush.bf16.msra.mxu0 0
    %1859 = vmatpush.bf16.msra.mxu0 0
    %1860 = vmatpush.bf16.msra.mxu0 0
    %1861 = vmatpush.bf16.msra.mxu0 0
    %1862 = vmatpush.bf16.msra.mxu0 0
    %1863 = vmatpush.bf16.msra.mxu0 %v1441
    %1864 = vmatpush.bf16.msra.mxu0 %v1440
    %1865 = vmatmul.bf16.gmra.mxu0 %v1855
    %v1866 = vpop.f32.mrf.mxu0
    %v1867 = vadd.f32 0.0, %v1866
    %v1868 = vpop.f32.mrf.mxu0
    %1869 = vdwg.mxu0
    %v1870 = vadd.f32 %v1420, %v1867
    %v1871 = vxor.u32 %v1870, 2147483648
    %v1872 = vmul.f32 %v1871, 1.442695
    %v1873 = vpow.pop %v1872
    %v1874 = vadd.f32 %v1873, 1.0
    %v1875 = vrcp.pop %v1874
    %v1876 = vmul.f32 %v1874, %v1875
    %v1877 = vsub.f32 1.0, %v1876
    %v1878 = vmul.f32 %v1875, %v1877
    %v1879 = vadd.f32 %v1875, %v1878
    %vm1880 = vweird.f32 %v1874
    %vm1881 = vweird.f32 %v1875
    %vm1882 = vmor %vm1880, %vm1881
    %v1883 = vsel %vm1882, %v1875, %v1879
    %v1884 = vand.u32 2147483647, %v1874
    %vm1885 = vcmp.eq.f32.partialorder %v1884, 8.507059e+37
    %v1886 = vand.u32 %v1874, 2147483648
    %v1887 = vor.u32 1.1754944e-38, %v1886
    %v1888 = vsel %vm1885, %v1887, %v1883
    %v1889 = vmul.f32 1.0, %v1888
    %v1890 = vtanh.pop %v1870
    %v1891 = vmul.f32 %v1889, %v1843
    %1893 = vrot.lane.b32.xlu0 %v1890, 32
    %v1894 = vpop.permute.xlu0 %1893
    %v1896 = vmul.f32 %v1889, %v1894
    %1898 = vrot.lane.b32.xlu0 %v1896, 32
    %v1899 = vpop.permute.xlu0 %1898
    %v1901 = vadd.f32 %v1891, %v1899
    %v1902 = vtanh.pop %v1901
    %1904 = vrot.lane.b32.xlu0 %v1902, 32
    %v1905 = vpop.permute.xlu0 %1904
    %v1907 = vmul.f32 %v1889, %v1905
    %1909 = vrot.lane.b32.xlu0 %v1907, 64
    %v1910 = vpop.permute.xlu0 %1909
    %s1912 = scalar_lea.vmem [#allocation13], 16
    %1913 = vst.msk [vmem:[%s1912] sm:$0xff] %vm170, %v1910
    %1915 = vrot.lane.b32.xlu0 %v1901, 96
    %v1916 = vpop.permute.xlu0 %1915
    %s1918 = scalar_lea.vmem [#allocation15], 16
    %1919 = vst.msk [vmem:[%s1918] sm:$0xff] %vm170, %v1916
    %v1920 = vpack.c.bf16 %v1907, %v1907
    %v1921 = vld [vmem:[#allocation11] sm:$0xf]
    %v1922 = vld [vmem:[#allocation11 + $0x4] sm:$0xf]
    %v1923 = vld [vmem:[#allocation11 + $0x8] sm:$0xf]
    %v1924 = vld [vmem:[#allocation11 + $0xc] sm:$0xf]
    %v1925 = vld [vmem:[%s10] sm:$0x1]
    %v1927 = vperm.slane %v1925, 0
    %1930 = vrot.lane.b32.xlu0 %v1920, 64
    %v1931 = vpop.permute.xlu0 %1930
    %v1936 = vunpack.c.l.b16 %v1921
    %v1937 = vunpack.c.l.b16 %v1922
    %v1938 = vunpack.c.l.b16 %v1923
    %v1939 = vunpack.c.l.b16 %v1924
    %v1940 = vpack.c.b16 %v1937, %v1936
    %v1941 = vpack.c.b16 %v1939, %v1938
    %v1945 = vsel %vm170, %v1931, 0
    %1947 = vmatpush.bf16.msra.mxu0 0
    %1948 = vmatpush.bf16.msra.mxu0 0
    %1949 = vmatpush.bf16.msra.mxu0 0
    %1950 = vmatpush.bf16.msra.mxu0 0
    %1951 = vmatpush.bf16.msra.mxu0 0
    %1952 = vmatpush.bf16.msra.mxu0 0
    %1953 = vmatpush.bf16.msra.mxu0 %v1941
    %1954 = vmatpush.bf16.msra.mxu0 %v1940
    %1955 = vmatmul.bf16.gmra.mxu0 %v1945
    %v1956 = vpop.f32.mrf.mxu0
    %v1957 = vadd.f32 %v1927, %v1956
    %v1958 = vpop.f32.mrf.mxu0
    %1959 = vdwg.mxu0
    %1960 = vst [vmem:[#allocation12] sm:$0xff] %v1957
    // Predicated region
    $region66: #{tpu_custom_call.1} parent=1 // pred_check
      _
    $region67: #{tpu_custom_call.1} parent=1 // pred_check_branch
      %1962 = sbr.rel (0) target = $region69
    $region68: #{tpu_custom_call.1} parent=1 // pred_region
      %1964 = vsyncadd [#allocation5], 0
      %s1966 = sshll.u32 [#allocation12], 4
      %s1967 = int_to_ptr.vmem [resolvable:$true] %s1966
      %s1968 = sshll.u32 %s11, 4
      %s1969 = int_to_ptr.hbm [resolvable:$true] %s1968
      %1971 = dma.vmem_to_hbm [thread:$0]  %s1967, 128, %s1969, [#allocation5]
    $region69: #{tpu_custom_call.1} parent=1 // pred_fallthru
      _
    // Predicated region
    $region70: #{tpu_custom_call.1} parent=1 // pred_check
      _
    $region71: #{tpu_custom_call.1} parent=1 // pred_check_branch
      %1973 = sbr.rel (0) target = $region73
    $region72: #{tpu_custom_call.1} parent=1 // pred_region
      %1975 = vsyncadd [#allocation14], 0
      %s1976 = sshll.u32 [#allocation13], 4
      %s1977 = int_to_ptr.vmem [resolvable:$true] %s1976
      %s1978 = sshll.u32 %s12, 4
      %s1979 = int_to_ptr.hbm [resolvable:$true] %s1978
      %1984 = dma.vmem_to_hbm [thread:$0]  %s1977, 384, %s1979, [#allocation14], 128, 128, 8
    $region73: #{tpu_custom_call.1} parent=1 // pred_fallthru
      _
    // Predicated region
    $region74: #{tpu_custom_call.1} parent=1 // pred_check
      _
    $region75: #{tpu_custom_call.1} parent=1 // pred_check_branch
      %1986 = sbr.rel (0) target = $region77
    $region76: #{tpu_custom_call.1} parent=1 // pred_region
      %1988 = vsyncadd [#allocation14], 0
      %s1989 = sshll.u32 [#allocation15], 4
      %s1990 = int_to_ptr.vmem [resolvable:$true] %s1989
      %s1991 = sshll.u32 %s13, 4
      %s1992 = int_to_ptr.hbm [resolvable:$true] %s1991
      %1997 = dma.vmem_to_hbm [thread:$0]  %s1990, 384, %s1992, [#allocation14], 128, 128, 8
    $region77: #{tpu_custom_call.1} parent=1 // pred_fallthru
      _
    // Predicated region
    $region78: #{tpu_custom_call.1} parent=1 // pred_check
      _
    $region79: #{tpu_custom_call.1} parent=1 // pred_check_branch
      %1999 = sbr.rel (0) target = $region81
    $region80: #{tpu_custom_call.1} parent=1 // pred_region
      %2001 = dma.done [#allocation5], 128
    $region81: #{tpu_custom_call.1} parent=1 // pred_fallthru
      _
    // Predicated region
    $region82: #{tpu_custom_call.1} parent=1 // pred_check
      _
    $region83: #{tpu_custom_call.1} parent=1 // pred_check_branch
      %2003 = sbr.rel (0) target = $region85
    $region84: #{tpu_custom_call.1} parent=1 // pred_region
      %2005 = dma.done [#allocation14], 384
    $region85: #{tpu_custom_call.1} parent=1 // pred_fallthru
      _
    // Predicated region
    $region86: #{tpu_custom_call.1} parent=1 // pred_check
      _
    $region87: #{tpu_custom_call.1} parent=1 // pred_check_branch
      %2007 = sbr.rel (0) target = $region89
    $region88: #{tpu_custom_call.1} parent=1 // pred_region
      %2009 = dma.done [#allocation14], 384
    $region89: #{tpu_custom_call.1} parent=1 // pred_fallthru
      _
    %2010 = vsyncpa [#allocation4], 1
    %2011 = vsyncpa [#allocation7], 1
    %2012 = vsyncpa [#allocation10], 1
    %2013 = vsyncpa [#allocation5], 1
    %2014 = vsyncpa [#allocation14], 1

</llo_original>
